<compile_context>
chip_gen: v7x
topology: tpu7x:2x2x1
jax: 0.10.0
libtpu: 0.0.40
codegen_flags: <defaults>
</compile_context>

<pallas_src>
import functools

import jax
import jax.numpy as jnp
import numpy as np
from jax.experimental import pallas as pl
from jax.experimental.pallas import tpu as pltpu


def _round_up(x, m):
    return ((x + m - 1) // m) * m


def _ebc_pooled_kernel(idx_ref, table_ref, out_ref, acc_ref, *, max_len, v_tile):
    """One grid step = (key, batch_tile, vocab_tile).

    idx_ref   : (Bt, L)  int32    padded bag indices, -1 = padding sentinel
    table_ref : (Vt, D)  bfloat16 vocab tile of this key's embedding table
    out_ref   : (Bt, D)  float32  slice of the final (batch, K*D) output
    acc_ref   : (Bt, D)  float32  VMEM accumulator across vocab tiles
    """
    v = pl.program_id(2)

    @pl.when(v == 0)
    def _():
        acc_ref[...] = jnp.zeros_like(acc_ref)

    idx = idx_ref[...]                      # (Bt, L) int32
    bt = idx.shape[0]

    # Vocabulary rows covered by this tile, shifted to global index space.
    iota_v = jax.lax.broadcasted_iota(jnp.int32, (bt, v_tile), 1) + v * v_tile

    # (Bt, Vt) per-bag counts accumulated over the small static bag-length
    # axis.  The -1 padding sentinel (and indices belonging to other vocab
    # tiles) never match, so no separate mask input/multiply is needed.
    counts = jnp.zeros((bt, v_tile), jnp.int32)
    for l in range(max_len):                # static unroll; max_len is small
        counts = counts + (idx[:, l:l + 1] == iota_v).astype(jnp.int32)

    # Counts are exact in bf16 for max_len <= 256; bf16 x bf16 on the MXU with
    # f32 accumulation.
    acc_ref[...] += jnp.dot(counts.astype(jnp.bfloat16), table_ref[...],
                            preferred_element_type=jnp.float32)

    @pl.when(v == pl.num_programs(2) - 1)
    def _():
        out_ref[...] = acc_ref[...].astype(out_ref.dtype)


def kjt_embedding_bag_collection(values, lengths, tables, *, num_keys, batch,
                                 max_len, batch_tile=128, v_tile=None):
    """Forward pass of KJTInputWrapper(EmbeddingBagCollection).

    values  : [total] int32      concatenated jagged indices (key-major, then batch)
    lengths : [num_keys * batch] int32
    tables  : [num_keys, V, D]   bfloat16 (or float32)
    returns : [batch, num_keys * D] float32   (KeyedTensor.values() layout)
    """
    K, V, D = tables.shape
    assert K == num_keys
    assert max_len <= 256, "bf16 counts are exact only up to 256 hits per row"

    # ---- KJT construction glue: lengths -> offsets -> padded dense bags ----
    lengths = lengths.astype(jnp.int32)
    offsets = jnp.concatenate(
        [jnp.zeros((1,), jnp.int32), jnp.cumsum(lengths, dtype=jnp.int32)])
    starts = offsets[:-1]                                          # [K*B]
    arange_l = jnp.arange(max_len, dtype=jnp.int32)
    in_bag = arange_l[None, :] < lengths[:, None]                  # [K*B, L]
    if values.shape[0] > 0:
        pos = starts[:, None] + arange_l[None, :]
        safe_pos = jnp.clip(pos, 0, values.shape[0] - 1)
        gathered = jnp.take(values, safe_pos).astype(jnp.int32)
        padded_idx = jnp.where(in_bag, gathered, jnp.int32(-1))    # -1 sentinel
    else:  # empty KJT: every bag is empty
        padded_idx = jnp.full((num_keys * batch, max_len), -1, jnp.int32)
    padded_idx = padded_idx.reshape(num_keys, batch, max_len)

    # ---- tiling / padding to TPU-friendly shapes ----
    tables = tables.astype(jnp.bfloat16)
    itemsize = 2  # bf16

    bt = min(batch_tile, _round_up(batch, 8))
    b_pad = _round_up(batch, bt)
    d_pad = _round_up(D, 128)                 # lane-dense output stores

    if v_tile is None:
        # Largest vocab tile whose double-buffered bf16 table fits a budget
        # that is safe on every generation (v7x has only 64 MiB VMEM).
        budget = 16 * 1024 * 1024
        v_tile = min(_round_up(V, 8),
                     max(8, (budget // (2 * d_pad * itemsize)) // 8 * 8))
    v_pad = _round_up(V, v_tile)

    if b_pad != batch:
        padded_idx = jnp.pad(padded_idx, ((0, 0), (0, b_pad - batch), (0, 0)),
                             constant_values=-1)
    if v_pad != V or d_pad != D:
        tables = jnp.pad(tables, ((0, 0), (0, v_pad - V), (0, d_pad - D)))

    # Explicit VMEM budget (double-buffered inputs/outputs + accumulator),
    # capped well under v7x's 64 MiB physical VMEM.
    vmem_bytes = (2 * v_tile * d_pad * itemsize     # table tiles
                  + 2 * bt * max_len * 4            # idx tiles
                  + 2 * bt * d_pad * 4              # output tiles
                  + bt * d_pad * 4)                 # accumulator scratch
    vmem_limit = int(min(max(4 * vmem_bytes, 16 * 1024 * 1024),
                         48 * 1024 * 1024))

    kernel = functools.partial(_ebc_pooled_kernel, max_len=max_len,
                               v_tile=v_tile)

    out = pl.pallas_call(
        kernel,
        out_shape=jax.ShapeDtypeStruct((b_pad, num_keys * d_pad), jnp.float32),
        grid=(num_keys, b_pad // bt, v_pad // v_tile),
        in_specs=[
            # idx block is constant across the vocab axis -> stays VMEM-resident.
            pl.BlockSpec((None, bt, max_len), lambda k, b, v: (k, b, 0)),
            pl.BlockSpec((None, v_tile, d_pad), lambda k, b, v: (k, v, 0)),
        ],
        # Final KeyedTensor layout written directly: rows = batch tile,
        # columns = this key's D-slice of the concatenated feature dim.
        out_specs=pl.BlockSpec((bt, d_pad), lambda k, b, v: (b, k)),
        scratch_shapes=[pltpu.VMEM((bt, d_pad), jnp.float32)],
        compiler_params=pltpu.CompilerParams(
            dimension_semantics=("parallel", "parallel", "arbitrary"),
            vmem_limit_bytes=vmem_limit),
    )(padded_idx, tables)

    if b_pad == batch and d_pad == D:
        return out
    return out.reshape(b_pad, num_keys, d_pad)[:batch, :, :D].reshape(
        batch, num_keys * D)


def _reference(values, lengths, tables, *, num_keys, batch):
    """Plain numpy reference (same bf16-stored tables, f32 math)."""
    values = np.asarray(values)
    lengths = np.asarray(lengths)
    tables_f32 = np.asarray(tables.astype(jnp.float32))
    K, V, D = tables_f32.shape
    offsets = np.concatenate([[0], np.cumsum(lengths)])
    out = np.zeros((batch, K * D), np.float32)
    for k in range(num_keys):
        for b in range(batch):
            bag = k * batch + b
            s, e = int(offsets[bag]), int(offsets[bag + 1])
            if e > s:
                out[b, k * D:(k + 1) * D] = tables_f32[k][values[s:e]].sum(axis=0)
    return out


if __name__ == "__main__":
    key = jax.random.PRNGKey(0)
    k_len, k_val, k_tab = jax.random.split(key, 3)

    num_keys = 2           # keys = ["f1", "f2"]
    batch = 256
    num_embeddings = 512   # V
    emb_dim = 128          # D (multiple of 128 -> lane-dense output)
    max_len = 8

    # Jagged structure: random bag lengths in [0, max_len]
    lengths = jax.random.randint(k_len, (num_keys * batch,), 0, max_len + 1,
                                 dtype=jnp.int32)
    total = int(jnp.sum(lengths))
    values = jax.random.randint(k_val, (total,), 0, num_embeddings,
                                dtype=jnp.int32)

    # Embedding tables (one per key), stacked, stored bf16.
    tables = jax.random.normal(
        k_tab, (num_keys, num_embeddings, emb_dim), dtype=jnp.float32
    ).astype(jnp.bfloat16)

    out = kjt_embedding_bag_collection(
        values, lengths, tables, num_keys=num_keys, batch=batch,
        max_len=max_len, batch_tile=128, v_tile=256)  # 2 vocab tiles exercised
    out = jax.block_until_ready(out)

    ref = _reference(values, lengths, tables, num_keys=num_keys, batch=batch)
    assert out.shape == (batch, num_keys * emb_dim)
    assert np.allclose(np.asarray(out), ref, atol=1e-4, rtol=1e-4), \
        "mismatch vs reference"

    print("KERNEL_OK")
</pallas_src>

<mosaic_0001>
module attributes {stable_mosaic.version = 11 : i64} {
  func.func @_ebc_pooled_kernel(%arg0: i32, %arg1: i32, %arg2: i32, %arg3: memref<1x128x8xi32, #tpu.memory_space<vmem>>, %arg4: memref<1x256x128xbf16, #tpu.memory_space<vmem>>, %arg5: memref<128x128xf32, #tpu.memory_space<vmem>>, %arg6: memref<128x128xf32, #tpu.memory_space<vmem>>) attributes {dimension_semantics = [#tpu.dimension_semantics<parallel>, #tpu.dimension_semantics<parallel>, #tpu.dimension_semantics<arbitrary>], iteration_bounds = array<i64: 2, 2, 2>, scalar_prefetch = 0 : i64, scratch_operands = 1 : i64, tpu.core_type = #tpu.core_type<tc>, window_params = [{transform_indices = @transform_0, window_bounds = array<i64: 1, 128, 8>}, {transform_indices = @transform_1, window_bounds = array<i64: 1, 256, 128>}, {transform_indices = @transform_2, window_bounds = array<i64: 128, 128>}]} {
    %c0_i32 = arith.constant 0 : i32
    %0 = arith.cmpi eq, %arg2, %c0_i32 : i32
    %1 = arith.extui %0 : i1 to i32
    %c0_i32_0 = arith.constant 0 : i32
    %2 = arith.cmpi ne, %1, %c0_i32_0 : i32
    scf.if %2 {
      %cst_12 = arith.constant 0.000000e+00 : f32
      %60 = vector.broadcast %cst_12 : f32 to vector<128x128xf32>
      %c0_13 = arith.constant 0 : index
      %c0_14 = arith.constant 0 : index
      %61 = vector.load %arg6[%c0_13, %c0_14] : memref<128x128xf32, #tpu.memory_space<vmem>>, vector<128x128xf32>
      tpu.vector_store %arg6[%c0_13, %c0_14], %60 {strides = array<i32>} : memref<128x128xf32, #tpu.memory_space<vmem>>, vector<128x128xf32>,
    } else {
    }
    %c0 = arith.constant 0 : index
    %c0_1 = arith.constant 0 : index
    %c0_2 = arith.constant 0 : index
    %3 = vector.load %arg3[%c0, %c0_1, %c0_2] : memref<1x128x8xi32, #tpu.memory_space<vmem>>, vector<1x128x8xi32>
    %4 = vector.shape_cast %3 : vector<1x128x8xi32> to vector<128x8xi32>
    %5 = tpu.iota {dimensions = array<i32: 1>} : vector<128x256xi32>
    %c256_i32 = arith.constant 256 : i32
    %6 = arith.muli %arg2, %c256_i32 : i32
    %7 = vector.broadcast %6 : i32 to vector<128x256xi32>
    %8 = arith.addi %5, %7 : vector<128x256xi32>
    %c0_i32_3 = arith.constant 0 : i32
    %9 = vector.broadcast %c0_i32_3 : i32 to vector<128x256xi32>
    %10 = vector.extract_strided_slice %4 {offsets = [0, 0], sizes = [128, 1], strides = [1, 1]} : vector<128x8xi32> to vector<128x1xi32>
    %11 = vector.broadcast %10 : vector<128x1xi32> to vector<128x256xi32>
    %12 = arith.cmpi eq, %11, %8 : vector<128x256xi32>
    %13 = arith.extui %12 : vector<128x256xi1> to vector<128x256xi32>
    %14 = arith.addi %9, %13 : vector<128x256xi32>
    %15 = vector.extract_strided_slice %4 {offsets = [0, 1], sizes = [128, 1], strides = [1, 1]} : vector<128x8xi32> to vector<128x1xi32>
    %16 = vector.broadcast %15 : vector<128x1xi32> to vector<128x256xi32>
    %17 = arith.cmpi eq, %16, %8 : vector<128x256xi32>
    %18 = arith.extui %17 : vector<128x256xi1> to vector<128x256xi32>
    %19 = arith.addi %14, %18 : vector<128x256xi32>
    %20 = vector.extract_strided_slice %4 {offsets = [0, 2], sizes = [128, 1], strides = [1, 1]} : vector<128x8xi32> to vector<128x1xi32>
    %21 = vector.broadcast %20 : vector<128x1xi32> to vector<128x256xi32>
    %22 = arith.cmpi eq, %21, %8 : vector<128x256xi32>
    %23 = arith.extui %22 : vector<128x256xi1> to vector<128x256xi32>
    %24 = arith.addi %19, %23 : vector<128x256xi32>
    %25 = vector.extract_strided_slice %4 {offsets = [0, 3], sizes = [128, 1], strides = [1, 1]} : vector<128x8xi32> to vector<128x1xi32>
    %26 = vector.broadcast %25 : vector<128x1xi32> to vector<128x256xi32>
    %27 = arith.cmpi eq, %26, %8 : vector<128x256xi32>
    %28 = arith.extui %27 : vector<128x256xi1> to vector<128x256xi32>
    %29 = arith.addi %24, %28 : vector<128x256xi32>
    %30 = vector.extract_strided_slice %4 {offsets = [0, 4], sizes = [128, 1], strides = [1, 1]} : vector<128x8xi32> to vector<128x1xi32>
    %31 = vector.broadcast %30 : vector<128x1xi32> to vector<128x256xi32>
    %32 = arith.cmpi eq, %31, %8 : vector<128x256xi32>
    %33 = arith.extui %32 : vector<128x256xi1> to vector<128x256xi32>
    %34 = arith.addi %29, %33 : vector<128x256xi32>
    %35 = vector.extract_strided_slice %4 {offsets = [0, 5], sizes = [128, 1], strides = [1, 1]} : vector<128x8xi32> to vector<128x1xi32>
    %36 = vector.broadcast %35 : vector<128x1xi32> to vector<128x256xi32>
    %37 = arith.cmpi eq, %36, %8 : vector<128x256xi32>
    %38 = arith.extui %37 : vector<128x256xi1> to vector<128x256xi32>
    %39 = arith.addi %34, %38 : vector<128x256xi32>
    %40 = vector.extract_strided_slice %4 {offsets = [0, 6], sizes = [128, 1], strides = [1, 1]} : vector<128x8xi32> to vector<128x1xi32>
    %41 = vector.broadcast %40 : vector<128x1xi32> to vector<128x256xi32>
    %42 = arith.cmpi eq, %41, %8 : vector<128x256xi32>
    %43 = arith.extui %42 : vector<128x256xi1> to vector<128x256xi32>
    %44 = arith.addi %39, %43 : vector<128x256xi32>
    %45 = vector.extract_strided_slice %4 {offsets = [0, 7], sizes = [128, 1], strides = [1, 1]} : vector<128x8xi32> to vector<128x1xi32>
    %46 = vector.broadcast %45 : vector<128x1xi32> to vector<128x256xi32>
    %47 = arith.cmpi eq, %46, %8 : vector<128x256xi32>
    %48 = arith.extui %47 : vector<128x256xi1> to vector<128x256xi32>
    %49 = arith.addi %44, %48 : vector<128x256xi32>
    %c0_4 = arith.constant 0 : index
    %c0_5 = arith.constant 0 : index
    %50 = vector.load %arg6[%c0_4, %c0_5] : memref<128x128xf32, #tpu.memory_space<vmem>>, vector<128x128xf32>
    %51 = arith.sitofp %49 : vector<128x256xi32> to vector<128x256xbf16>
    %c0_6 = arith.constant 0 : index
    %c0_7 = arith.constant 0 : index
    %c0_8 = arith.constant 0 : index
    %52 = vector.load %arg4[%c0_6, %c0_7, %c0_8] : memref<1x256x128xbf16, #tpu.memory_space<vmem>>, vector<1x256x128xbf16>
    %53 = vector.shape_cast %52 : vector<1x256x128xbf16> to vector<256x128xbf16>
    %cst = arith.constant dense<0.000000e+00> : vector<128x128xf32>
    %54 = tpu.matmul %51, %53, %cst {dimension_numbers = #tpu.dot_dimension_numbers<[1], [0], [0], [1], [0, 0, 1, 1], [], []>} : vector<128x256xbf16>, vector<256x128xbf16>, vector<128x128xf32> -> vector<128x128xf32>
    %55 = arith.addf %50, %54 : vector<128x128xf32>
    %c0_9 = arith.constant 0 : index
    %c0_10 = arith.constant 0 : index
    %56 = vector.load %arg6[%c0_9, %c0_10] : memref<128x128xf32, #tpu.memory_space<vmem>>, vector<128x128xf32>
    tpu.vector_store %arg6[%c0_9, %c0_10], %55 {strides = array<i32>} : memref<128x128xf32, #tpu.memory_space<vmem>>, vector<128x128xf32>,
    %c1_i32 = arith.constant 1 : i32
    %57 = arith.cmpi eq, %arg2, %c1_i32 : i32
    %58 = arith.extui %57 : i1 to i32
    %c0_i32_11 = arith.constant 0 : i32
    %59 = arith.cmpi ne, %58, %c0_i32_11 : i32
    scf.if %59 {
      %c0_12 = arith.constant 0 : index
      %c0_13 = arith.constant 0 : index
      %60 = vector.load %arg6[%c0_12, %c0_13] : memref<128x128xf32, #tpu.memory_space<vmem>>, vector<128x128xf32>
      %c0_14 = arith.constant 0 : index
      %c0_15 = arith.constant 0 : index
      %61 = vector.load %arg5[%c0_14, %c0_15] : memref<128x128xf32, #tpu.memory_space<vmem>>, vector<128x128xf32>
      tpu.vector_store %arg5[%c0_14, %c0_15], %60 {strides = array<i32>} : memref<128x128xf32, #tpu.memory_space<vmem>>, vector<128x128xf32>,
    } else {
    }
    return
  }
  func.func @transform_0(%arg0: i32, %arg1: i32, %arg2: i32) -> (i32, i32, i32) {
    %c0_i32 = arith.constant 0 : i32
    %c0_i32_0 = arith.constant 0 : i32
    return %arg0, %arg1, %c0_i32 : i32, i32, i32
  }
  func.func @transform_1(%arg0: i32, %arg1: i32, %arg2: i32) -> (i32, i32, i32) {
    %c0_i32 = arith.constant 0 : i32
    %c0_i32_0 = arith.constant 0 : i32
    return %arg0, %arg2, %c0_i32 : i32, i32, i32
  }
  func.func @transform_2(%arg0: i32, %arg1: i32, %arg2: i32) -> (i32, i32) {
    %c0_i32 = arith.constant 0 : i32
    return %arg1, %arg0 : i32, i32
  }
}

</mosaic_0001>

<llo_original>
// kernel: tpu_custom_call.1
$region0: #{tpu_custom_call.1}
  #allocation0 [shape = 'u32[]', space=smem, size = 0x4, offset = 0x4, fixed_abs, tag = 'smem constant byte address 0x4 - core index']
  #allocation1 [shape = 'u32[144,128]{1,0:T(1,128)}', space=vmem, size = 0x12000, scoped, tag = 'internal scratch']
  #allocation2 [shape = 'f32[128,128]{1,0:T(8,128)}', space=vmem, size = 0x10000, scoped, tag = 'scratch operand']
  %s0 = inlined_call_operand.vmem [shape: s32[2,256,8], index: 0, kind: input, shape index: {}]
  %s1 = inlined_call_operand.vmem [shape: bf16[2,512,128], index: 1, kind: input, shape index: {}]
  %s2 = inlined_call_operand.hbm [shape: f32[256,256], index: 2, kind: output, shape index: {}]
  %s3 = sld [smem:[#allocation0]]
  $region49: #{tpu_custom_call.1} parent=0
    _
  %s5 = ssub.s32 1, %s3
  %s6 = scalar_select 0, %s5, %s3
  $region1: #{tpu_custom_call.1} parent=0
    #allocation3 [shape = 'u8[131072]{0}', space=vmem, size = 0x20000, scoped, tag = 'output window, operand 0']
    #allocation4 [shape = 's32[2]{0}', space=sflag, size = 0x8, scoped, tag = 'scoped memory for tpu_custom_call.1']
    %7 = vsyncpa [#allocation4], 0
    %s8 = scalar_lea.sflag [#allocation4], 1
    %9 = vsyncpa %s8, 0
    loop: start=0, step=1, limit=10
    $region2: #{tpu_custom_call.1} parent=1 // loop_pre_header
      _
    $region3: #{tpu_custom_call.1} parent=1 // loop_header
      %s11 = sphi 0, %s15
      %p12 = scmp.ge.s32.totalorder %s11, 10
      %s18 = sphi 0, %s37
      %s19 = sphi 0, %s33
      %s20 = sphi 0, %s29
      %s21 = sphi 0, %s18
      %s22 = sphi 0, %s19
      %s23 = sphi 0, %s20
      %s24 = sphi 0, %s21
      %s25 = sphi 0, %s22
      %s26 = sphi 0, %s23
      %s42 = sphi 0, %s44
      %s45 = sphi 0, %s42
      %s46 = sphi 0, %s45
      %s62 = sphi 0, %s46
      %s70 = sphi 0, %s72
      %s73 = sphi 0, %s70
      %s74 = sphi 0, %s73
      %s90 = sphi 0, %s74
      %s98 = sphi 0, %s100
      %s101 = sphi 0, %s98
      %s102 = sphi 0, %s101
      %s118 = sphi 0, %s102
    $region4: #{tpu_custom_call.1} parent=1 // loop_header_branch
      %14 = sbr.rel (%p12) target = $region8
    $region5: #{tpu_custom_call.1} parent=1 // loop_body
      %s16 = ssub.s32 %s11, 1
      %s17 = ssub.s32 %s11, 2
      %s27 = sadd.s32 1, %s20
      %p28 = scmp.ge.s32.totalorder %s27, 2
      %s29 = scalar_select %p28, 0, %s27
      %s30 = sadd.s32 1, %s19
      %s31 = scalar_select %p28, %s30, %s19
      %p32 = scmp.ge.s32.totalorder %s31, 2
      %s33 = scalar_select %p32, 0, %s31
      %s34 = sadd.s32 1, %s18
      %s35 = scalar_select %p32, %s34, %s18
      %p36 = scmp.ge.s32.totalorder %s35, 2
      %s37 = scalar_select %p36, 0, %s35
      %s38 = ssub.s32 %s18, %s37
      %s39 = ssub.s32 %s19, %s33
      %s40 = sor.u32 %s38, %s39
      %p41 = scmp.eq.s32.totalorder %s40, 0
      %s43 = sadd.s32 %s42, 1
      %s44 = scalar_select %p41, %s42, %s43
      %p47 = pneg %p41
      %p48 = scmp.eq.s32.totalorder %s11, 7
      %p49 = por %p47, %p48
      %p50 = scmp.ne.s32.totalorder %s42, %s45
      %p51 = scmp.eq.s32.totalorder %s11, 0
      %p52 = por %p50, %p51
      %p53 = scmp.ne.s32.totalorder %s42, %s45
      %p54 = scmp.eq.s32.totalorder %s16, 7
      %p55 = por %p53, %p54
      %p56 = scmp.ne.s32.totalorder %s45, %s46
      %p57 = scmp.eq.s32.totalorder %s16, 0
      %p58 = por %p56, %p57
      %p59 = scmp.ne.s32.totalorder %s45, %s46
      %p60 = scmp.eq.s32.totalorder %s17, 7
      %p61 = por %p59, %p60
      %p63 = scmp.ne.s32.totalorder %s46, %s62
      %p64 = scmp.eq.s32.totalorder %s17, 0
      %p65 = por %p63, %p64
      %s66 = ssub.s32 %s18, %s37
      %s67 = ssub.s32 %s20, %s29
      %s68 = sor.u32 %s66, %s67
      %p69 = scmp.eq.s32.totalorder %s68, 0
      %s71 = sadd.s32 %s70, 1
      %s72 = scalar_select %p69, %s70, %s71
      %p75 = pneg %p69
      %p76 = scmp.eq.s32.totalorder %s11, 7
      %p77 = por %p75, %p76
      %p78 = scmp.ne.s32.totalorder %s70, %s73
      %p79 = scmp.eq.s32.totalorder %s11, 0
      %p80 = por %p78, %p79
      %p81 = scmp.ne.s32.totalorder %s70, %s73
      %p82 = scmp.eq.s32.totalorder %s16, 7
      %p83 = por %p81, %p82
      %p84 = scmp.ne.s32.totalorder %s73, %s74
      %p85 = scmp.eq.s32.totalorder %s16, 0
      %p86 = por %p84, %p85
      %p87 = scmp.ne.s32.totalorder %s73, %s74
      %p88 = scmp.eq.s32.totalorder %s17, 7
      %p89 = por %p87, %p88
      %p91 = scmp.ne.s32.totalorder %s74, %s90
      %p92 = scmp.eq.s32.totalorder %s17, 0
      %p93 = por %p91, %p92
      %s94 = ssub.s32 %s19, %s33
      %s95 = ssub.s32 %s18, %s37
      %s96 = sor.u32 %s94, %s95
      %p97 = scmp.eq.s32.totalorder %s96, 0
      %s99 = sadd.s32 %s98, 1
      %s100 = scalar_select %p97, %s98, %s99
      %p103 = pneg %p97
      %p104 = scmp.eq.s32.totalorder %s11, 7
      %p105 = por %p103, %p104
      %p106 = scmp.ne.s32.totalorder %s98, %s101
      %p107 = scmp.eq.s32.totalorder %s11, 0
      %p108 = por %p106, %p107
      %p109 = scmp.ne.s32.totalorder %s98, %s101
      %p110 = scmp.eq.s32.totalorder %s16, 7
      %p111 = por %p109, %p110
      %p112 = scmp.ne.s32.totalorder %s101, %s102
      %p113 = scmp.eq.s32.totalorder %s16, 0
      %p114 = por %p112, %p113
      %p115 = scmp.ne.s32.totalorder %s101, %s102
      %p116 = scmp.eq.s32.totalorder %s17, 7
      %p117 = por %p115, %p116
      %p119 = scmp.ne.s32.totalorder %s102, %s118
      %p120 = scmp.eq.s32.totalorder %s17, 0
      %p121 = por %p119, %p120
      %p122 = scmp.le.s32.totalorder 1, %s11
      %p123 = scmp.lt.s32.totalorder %s11, 9
      %p124 = pnand %p122, %p123
      %p125 = pneg %p124
      // Predicated region
      $region9: #{tpu_custom_call.1} parent=5 // pred_check
        _
      $region10: #{tpu_custom_call.1} parent=5 // pred_check_branch
        %127 = sbr.rel (%p124) target = $region12
      $region11: #{tpu_custom_call.1} parent=5 // pred_region
        %s128 = ssub.s32 %s11, 1
      $region12: #{tpu_custom_call.1} parent=5 // pred_fallthru
        _
      %p129 = scmp.lt.s32.totalorder %s11, 8
      // Predicated region
      $region13: #{tpu_custom_call.1} parent=5 // pred_check
        %p130 = pneg %p129
      $region14: #{tpu_custom_call.1} parent=5 // pred_check_branch
        %132 = sbr.rel (%p130) target = $region16
      $region15: #{tpu_custom_call.1} parent=5 // pred_region
        // Predicated region
        $region17: #{tpu_custom_call.1} parent=15 // pred_check
          %p133 = pneg %p52
        $region18: #{tpu_custom_call.1} parent=15 // pred_check_branch
          %135 = sbr.rel (%p133) target = $region20
        $region19: #{tpu_custom_call.1} parent=15 // pred_region
          %s136 = smul.u32 16, %s19
          %p137 = scmp.lt.s32.totalorder %s18, 1
          %s138 = scalar_select %p137, %s18, 1
          %p139 = scmp.lt.s32.totalorder %s136, 31
          %s140 = scalar_select %p139, %s136, 31
          %s141 = smul.addr %s138, 32
          %s142 = sadd.s32 %s140, %s141
          %s143 = smul.addr %s142, 8
          %s144 = scalar_lea.vmem %s0, %s143
          %s145 = smul.u32 16, %s19
        $region20: #{tpu_custom_call.1} parent=15 // pred_fallthru
          _
        // Predicated region
        $region21: #{tpu_custom_call.1} parent=15 // pred_check
          %p146 = pneg %p80
        $region22: #{tpu_custom_call.1} parent=15 // pred_check_branch
          %148 = sbr.rel (%p146) target = $region24
        $region23: #{tpu_custom_call.1} parent=15 // pred_region
          %s149 = smul.u32 32, %s20
          %p150 = scmp.lt.s32.totalorder %s18, 1
          %s151 = scalar_select %p150, %s18, 1
          %p152 = scmp.lt.s32.totalorder %s149, 63
          %s153 = scalar_select %p152, %s149, 63
          %s154 = smul.addr %s151, 64
          %s155 = sadd.s32 %s153, %s154
          %s156 = smul.addr %s155, 4
          %s157 = scalar_lea.vmem %s1, %s156
          %s158 = smul.u32 32, %s20
        $region24: #{tpu_custom_call.1} parent=15 // pred_fallthru
          _
      $region16: #{tpu_custom_call.1} parent=5 // pred_fallthru
        _
      %p159 = scmp.le.s32.totalorder 1, %s11
      %p160 = scmp.lt.s32.totalorder %s11, 9
      %p161 = pnand %p159, %p160
      %p162 = pneg %p161
      // Predicated region
      $region25: #{tpu_custom_call.1} parent=5 // pred_check
        _
      $region26: #{tpu_custom_call.1} parent=5 // pred_check_branch
        %164 = sbr.rel (%p161) target = $region28
      $region27: #{tpu_custom_call.1} parent=5 // pred_region
        %s165 = ssub.s32 %s11, 1
        %s166 = smul.u32 16, %s22
        %p167 = scmp.lt.s32.totalorder %s21, 1
        %s168 = scalar_select %p167, %s21, 1
        %p169 = scmp.lt.s32.totalorder %s166, 31
        %s170 = scalar_select %p169, %s166, 31
        %s171 = smul.addr %s168, 32
        %s172 = sadd.s32 %s170, %s171
        %s173 = smul.addr %s172, 8
        %s174 = scalar_lea.vmem %s0, %s173
        %p175 = pneg %p58
        %p176 = pneg %p55
        %s177 = smul.u32 32, %s23
        %p178 = scmp.lt.s32.totalorder %s21, 1
        %s179 = scalar_select %p178, %s21, 1
        %p180 = scmp.lt.s32.totalorder %s177, 63
        %s181 = scalar_select %p180, %s177, 63
        %s182 = smul.addr %s179, 64
        %s183 = sadd.s32 %s181, %s182
        %s184 = smul.addr %s183, 4
        %s185 = scalar_lea.vmem %s1, %s184
        %p186 = pneg %p86
        %p187 = pneg %p83
        %p188 = pneg %p114
        %p189 = pneg %p111
        %s190 = sand.u32 %s101, 1
        %s191 = scalar_lea.sflag [#allocation4], %s190
        %s192 = sand.u32 %s101, 1
        %s193 = smul.addr %s192, 128
        %s194 = scalar_lea.vmem [#allocation3], %s193
        %s195 = smul.u32 16, %s22
        %p196 = scmp.lt.s32.totalorder %s21, 1
        %s197 = scalar_select %p196, %s21, 1
        %p198 = scmp.lt.s32.totalorder %s195, 31
        %s199 = scalar_select %p198, %s195, 31
        %s200 = smul.addr %s197, 32
        %s201 = sadd.s32 %s199, %s200
        %s202 = smul.addr %s201, 8
        %s203 = scalar_lea.vmem %s0, %s202
        %s204 = smul.u32 16, %s22
        %s205 = smul.u32 32, %s23
        %p206 = scmp.lt.s32.totalorder %s21, 1
        %s207 = scalar_select %p206, %s21, 1
        %p208 = scmp.lt.s32.totalorder %s205, 63
        %s209 = scalar_select %p208, %s205, 63
        %s210 = smul.addr %s207, 64
        %s211 = sadd.s32 %s209, %s210
        %s212 = smul.addr %s211, 4
        %s213 = scalar_lea.vmem %s1, %s212
        %s214 = smul.u32 32, %s23
        %s215 = smul.u32 16, %s22
        %p217 = scmp.eq.s32.totalorder %s23, 0
        // Predicated region
        $region29: #{tpu_custom_call.1} parent=27 // pred_check
          %p218 = pneg %p217
        $region30: #{tpu_custom_call.1} parent=27 // pred_check_branch
          %220 = sbr.rel (%p218) target = $region32
        $region31: #{tpu_custom_call.1} parent=27 // pred_region
          %221 = vst [vmem:[#allocation2] sm:$0xff] 0.0
          %222 = vst [vmem:[#allocation2 + $0x8] sm:$0xff] 0.0
          %223 = vst [vmem:[#allocation2 + $0x10] sm:$0xff] 0.0
          %224 = vst [vmem:[#allocation2 + $0x18] sm:$0xff] 0.0
          %225 = vst [vmem:[#allocation2 + $0x20] sm:$0xff] 0.0
          %226 = vst [vmem:[#allocation2 + $0x28] sm:$0xff] 0.0
          %227 = vst [vmem:[#allocation2 + $0x30] sm:$0xff] 0.0
          %228 = vst [vmem:[#allocation2 + $0x38] sm:$0xff] 0.0
          %229 = vst [vmem:[#allocation2 + $0x40] sm:$0xff] 0.0
          %230 = vst [vmem:[#allocation2 + $0x48] sm:$0xff] 0.0
          %231 = vst [vmem:[#allocation2 + $0x50] sm:$0xff] 0.0
          %232 = vst [vmem:[#allocation2 + $0x58] sm:$0xff] 0.0
          %233 = vst [vmem:[#allocation2 + $0x60] sm:$0xff] 0.0
          %234 = vst [vmem:[#allocation2 + $0x68] sm:$0xff] 0.0
          %235 = vst [vmem:[#allocation2 + $0x70] sm:$0xff] 0.0
          %236 = vst [vmem:[#allocation2 + $0x78] sm:$0xff] 0.0
        $region32: #{tpu_custom_call.1} parent=27 // pred_fallthru
          _
        %v237 = vld [vmem:[%s203] sm:$0xff]
        %v238 = vld [vmem:[%s203 + $0x8] sm:$0xff]
        %v239 = vld [vmem:[%s203 + $0x10] sm:$0xff]
        %v240 = vld [vmem:[%s203 + $0x18] sm:$0xff]
        %v241 = vld [vmem:[%s203 + $0x20] sm:$0xff]
        %v242 = vld [vmem:[%s203 + $0x28] sm:$0xff]
        %v243 = vld [vmem:[%s203 + $0x30] sm:$0xff]
        %v244 = vld [vmem:[%s203 + $0x38] sm:$0xff]
        %v245 = vld [vmem:[%s203 + $0x40] sm:$0xff]
        %v246 = vld [vmem:[%s203 + $0x48] sm:$0xff]
        %v247 = vld [vmem:[%s203 + $0x50] sm:$0xff]
        %v248 = vld [vmem:[%s203 + $0x58] sm:$0xff]
        %v249 = vld [vmem:[%s203 + $0x60] sm:$0xff]
        %v250 = vld [vmem:[%s203 + $0x68] sm:$0xff]
        %v251 = vld [vmem:[%s203 + $0x70] sm:$0xff]
        %v252 = vld [vmem:[%s203 + $0x78] sm:$0xff]
        %v253 = vlaneseq
        %v254 = vand.u32 %v253, 127
        %v255 = vadd.s32 %v254, 128
        %s256 = smul.u32 %s23, 256
        %v257 = vstv %s256
        %v258 = vadd.s32 %v254, %v257
        %v259 = vadd.s32 %v255, %v257
        %260 = vset.pattern.permute.xlu0 0
        %261 = vperm.xlu0 %260, %v237
        %v262 = vpop.permute.xlu0 %261
        %263 = vset.pattern.permute.xlu0 0
        %264 = vperm.xlu0 %263, %v238
        %v265 = vpop.permute.xlu0 %264
        %266 = vset.pattern.permute.xlu0 0
        %267 = vperm.xlu0 %266, %v239
        %v268 = vpop.permute.xlu0 %267
        %269 = vset.pattern.permute.xlu0 0
        %270 = vperm.xlu0 %269, %v240
        %v271 = vpop.permute.xlu0 %270
        %272 = vset.pattern.permute.xlu0 0
        %273 = vperm.xlu0 %272, %v241
        %v274 = vpop.permute.xlu0 %273
        %275 = vset.pattern.permute.xlu0 0
        %276 = vperm.xlu0 %275, %v242
        %v277 = vpop.permute.xlu0 %276
        %278 = vset.pattern.permute.xlu0 0
        %279 = vperm.xlu0 %278, %v243
        %v280 = vpop.permute.xlu0 %279
        %281 = vset.pattern.permute.xlu0 0
        %282 = vperm.xlu0 %281, %v244
        %v283 = vpop.permute.xlu0 %282
        %284 = vset.pattern.permute.xlu0 0
        %285 = vperm.xlu0 %284, %v245
        %v286 = vpop.permute.xlu0 %285
        %287 = vset.pattern.permute.xlu0 0
        %288 = vperm.xlu0 %287, %v246
        %v289 = vpop.permute.xlu0 %288
        %290 = vset.pattern.permute.xlu0 0
        %291 = vperm.xlu0 %290, %v247
        %v292 = vpop.permute.xlu0 %291
        %293 = vset.pattern.permute.xlu0 0
        %294 = vperm.xlu0 %293, %v248
        %v295 = vpop.permute.xlu0 %294
        %296 = vset.pattern.permute.xlu0 0
        %297 = vperm.xlu0 %296, %v249
        %v298 = vpop.permute.xlu0 %297
        %299 = vset.pattern.permute.xlu0 0
        %300 = vperm.xlu0 %299, %v250
        %v301 = vpop.permute.xlu0 %300
        %302 = vset.pattern.permute.xlu0 0
        %303 = vperm.xlu0 %302, %v251
        %v304 = vpop.permute.xlu0 %303
        %305 = vset.pattern.permute.xlu0 0
        %306 = vperm.xlu0 %305, %v252
        %v307 = vpop.permute.xlu0 %306
        %vm308 = vcmp.eq.s32.totalorder %v262, %v258
        %vm309 = vcmp.eq.s32.totalorder %v262, %v259
        %vm310 = vcmp.eq.s32.totalorder %v265, %v258
        %vm311 = vcmp.eq.s32.totalorder %v265, %v259
        %vm312 = vcmp.eq.s32.totalorder %v268, %v258
        %vm313 = vcmp.eq.s32.totalorder %v268, %v259
        %vm314 = vcmp.eq.s32.totalorder %v271, %v258
        %vm315 = vcmp.eq.s32.totalorder %v271, %v259
        %vm316 = vcmp.eq.s32.totalorder %v274, %v258
        %vm317 = vcmp.eq.s32.totalorder %v274, %v259
        %vm318 = vcmp.eq.s32.totalorder %v277, %v258
        %vm319 = vcmp.eq.s32.totalorder %v277, %v259
        %vm320 = vcmp.eq.s32.totalorder %v280, %v258
        %vm321 = vcmp.eq.s32.totalorder %v280, %v259
        %vm322 = vcmp.eq.s32.totalorder %v283, %v258
        %vm323 = vcmp.eq.s32.totalorder %v283, %v259
        %vm324 = vcmp.eq.s32.totalorder %v286, %v258
        %vm325 = vcmp.eq.s32.totalorder %v286, %v259
        %vm326 = vcmp.eq.s32.totalorder %v289, %v258
        %vm327 = vcmp.eq.s32.totalorder %v289, %v259
        %vm328 = vcmp.eq.s32.totalorder %v292, %v258
        %vm329 = vcmp.eq.s32.totalorder %v292, %v259
        %vm330 = vcmp.eq.s32.totalorder %v295, %v258
        %vm331 = vcmp.eq.s32.totalorder %v295, %v259
        %vm332 = vcmp.eq.s32.totalorder %v298, %v258
        %vm333 = vcmp.eq.s32.totalorder %v298, %v259
        %vm334 = vcmp.eq.s32.totalorder %v301, %v258
        %vm335 = vcmp.eq.s32.totalorder %v301, %v259
        %vm336 = vcmp.eq.s32.totalorder %v304, %v258
        %vm337 = vcmp.eq.s32.totalorder %v304, %v259
        %vm338 = vcmp.eq.s32.totalorder %v307, %v258
        %vm339 = vcmp.eq.s32.totalorder %v307, %v259
        %v340 = vsel %vm308, 1, 0
        %v341 = vsel %vm309, 1, 0
        %v342 = vsel %vm310, 1, 0
        %v343 = vsel %vm311, 1, 0
        %v344 = vsel %vm312, 1, 0
        %v345 = vsel %vm313, 1, 0
        %v346 = vsel %vm314, 1, 0
        %v347 = vsel %vm315, 1, 0
        %v348 = vsel %vm316, 1, 0
        %v349 = vsel %vm317, 1, 0
        %v350 = vsel %vm318, 1, 0
        %v351 = vsel %vm319, 1, 0
        %v352 = vsel %vm320, 1, 0
        %v353 = vsel %vm321, 1, 0
        %v354 = vsel %vm322, 1, 0
        %v355 = vsel %vm323, 1, 0
        %v356 = vsel %vm324, 1, 0
        %v357 = vsel %vm325, 1, 0
        %v358 = vsel %vm326, 1, 0
        %v359 = vsel %vm327, 1, 0
        %v360 = vsel %vm328, 1, 0
        %v361 = vsel %vm329, 1, 0
        %v362 = vsel %vm330, 1, 0
        %v363 = vsel %vm331, 1, 0
        %v364 = vsel %vm332, 1, 0
        %v365 = vsel %vm333, 1, 0
        %v366 = vsel %vm334, 1, 0
        %v367 = vsel %vm335, 1, 0
        %v368 = vsel %vm336, 1, 0
        %v369 = vsel %vm337, 1, 0
        %v370 = vsel %vm338, 1, 0
        %v371 = vsel %vm339, 1, 0
        %372 = vset.pattern.permute.xlu0 1
        %373 = vperm.xlu0 %372, %v237
        %v374 = vpop.permute.xlu0 %373
        %375 = vset.pattern.permute.xlu0 1
        %376 = vperm.xlu0 %375, %v238
        %v377 = vpop.permute.xlu0 %376
        %378 = vset.pattern.permute.xlu0 1
        %379 = vperm.xlu0 %378, %v239
        %v380 = vpop.permute.xlu0 %379
        %381 = vset.pattern.permute.xlu0 1
        %382 = vperm.xlu0 %381, %v240
        %v383 = vpop.permute.xlu0 %382
        %384 = vset.pattern.permute.xlu0 1
        %385 = vperm.xlu0 %384, %v241
        %v386 = vpop.permute.xlu0 %385
        %387 = vset.pattern.permute.xlu0 1
        %388 = vperm.xlu0 %387, %v242
        %v389 = vpop.permute.xlu0 %388
        %390 = vset.pattern.permute.xlu0 1
        %391 = vperm.xlu0 %390, %v243
        %v392 = vpop.permute.xlu0 %391
        %393 = vset.pattern.permute.xlu0 1
        %394 = vperm.xlu0 %393, %v244
        %v395 = vpop.permute.xlu0 %394
        %396 = vset.pattern.permute.xlu0 1
        %397 = vperm.xlu0 %396, %v245
        %v398 = vpop.permute.xlu0 %397
        %399 = vset.pattern.permute.xlu0 1
        %400 = vperm.xlu0 %399, %v246
        %v401 = vpop.permute.xlu0 %400
        %402 = vset.pattern.permute.xlu0 1
        %403 = vperm.xlu0 %402, %v247
        %v404 = vpop.permute.xlu0 %403
        %405 = vset.pattern.permute.xlu0 1
        %406 = vperm.xlu0 %405, %v248
        %v407 = vpop.permute.xlu0 %406
        %408 = vset.pattern.permute.xlu0 1
        %409 = vperm.xlu0 %408, %v249
        %v410 = vpop.permute.xlu0 %409
        %411 = vset.pattern.permute.xlu0 1
        %412 = vperm.xlu0 %411, %v250
        %v413 = vpop.permute.xlu0 %412
        %414 = vset.pattern.permute.xlu0 1
        %415 = vperm.xlu0 %414, %v251
        %v416 = vpop.permute.xlu0 %415
        %417 = vset.pattern.permute.xlu0 1
        %418 = vperm.xlu0 %417, %v252
        %v419 = vpop.permute.xlu0 %418
        %vm420 = vcmp.eq.s32.totalorder %v374, %v258
        %vm421 = vcmp.eq.s32.totalorder %v374, %v259
        %vm422 = vcmp.eq.s32.totalorder %v377, %v258
        %vm423 = vcmp.eq.s32.totalorder %v377, %v259
        %vm424 = vcmp.eq.s32.totalorder %v380, %v258
        %vm425 = vcmp.eq.s32.totalorder %v380, %v259
        %vm426 = vcmp.eq.s32.totalorder %v383, %v258
        %vm427 = vcmp.eq.s32.totalorder %v383, %v259
        %vm428 = vcmp.eq.s32.totalorder %v386, %v258
        %vm429 = vcmp.eq.s32.totalorder %v386, %v259
        %vm430 = vcmp.eq.s32.totalorder %v389, %v258
        %vm431 = vcmp.eq.s32.totalorder %v389, %v259
        %vm432 = vcmp.eq.s32.totalorder %v392, %v258
        %vm433 = vcmp.eq.s32.totalorder %v392, %v259
        %vm434 = vcmp.eq.s32.totalorder %v395, %v258
        %vm435 = vcmp.eq.s32.totalorder %v395, %v259
        %vm436 = vcmp.eq.s32.totalorder %v398, %v258
        %vm437 = vcmp.eq.s32.totalorder %v398, %v259
        %vm438 = vcmp.eq.s32.totalorder %v401, %v258
        %vm439 = vcmp.eq.s32.totalorder %v401, %v259
        %vm440 = vcmp.eq.s32.totalorder %v404, %v258
        %vm441 = vcmp.eq.s32.totalorder %v404, %v259
        %vm442 = vcmp.eq.s32.totalorder %v407, %v258
        %vm443 = vcmp.eq.s32.totalorder %v407, %v259
        %vm444 = vcmp.eq.s32.totalorder %v410, %v258
        %vm445 = vcmp.eq.s32.totalorder %v410, %v259
        %vm446 = vcmp.eq.s32.totalorder %v413, %v258
        %vm447 = vcmp.eq.s32.totalorder %v413, %v259
        %vm448 = vcmp.eq.s32.totalorder %v416, %v258
        %vm449 = vcmp.eq.s32.totalorder %v416, %v259
        %vm450 = vcmp.eq.s32.totalorder %v419, %v258
        %vm451 = vcmp.eq.s32.totalorder %v419, %v259
        %v452 = vsel %vm420, 1, 0
        %v453 = vsel %vm421, 1, 0
        %v454 = vsel %vm422, 1, 0
        %v455 = vsel %vm423, 1, 0
        %v456 = vsel %vm424, 1, 0
        %v457 = vsel %vm425, 1, 0
        %v458 = vsel %vm426, 1, 0
        %v459 = vsel %vm427, 1, 0
        %v460 = vsel %vm428, 1, 0
        %v461 = vsel %vm429, 1, 0
        %v462 = vsel %vm430, 1, 0
        %v463 = vsel %vm431, 1, 0
        %v464 = vsel %vm432, 1, 0
        %v465 = vsel %vm433, 1, 0
        %v466 = vsel %vm434, 1, 0
        %v467 = vsel %vm435, 1, 0
        %v468 = vsel %vm436, 1, 0
        %v469 = vsel %vm437, 1, 0
        %v470 = vsel %vm438, 1, 0
        %v471 = vsel %vm439, 1, 0
        %v472 = vsel %vm440, 1, 0
        %v473 = vsel %vm441, 1, 0
        %v474 = vsel %vm442, 1, 0
        %v475 = vsel %vm443, 1, 0
        %v476 = vsel %vm444, 1, 0
        %v477 = vsel %vm445, 1, 0
        %v478 = vsel %vm446, 1, 0
        %v479 = vsel %vm447, 1, 0
        %v480 = vsel %vm448, 1, 0
        %v481 = vsel %vm449, 1, 0
        %v482 = vsel %vm450, 1, 0
        %v483 = vsel %vm451, 1, 0
        %v484 = vadd.s32 %v340, %v452
        %v485 = vadd.s32 %v341, %v453
        %v486 = vadd.s32 %v342, %v454
        %v487 = vadd.s32 %v343, %v455
        %v488 = vadd.s32 %v344, %v456
        %v489 = vadd.s32 %v345, %v457
        %v490 = vadd.s32 %v346, %v458
        %v491 = vadd.s32 %v347, %v459
        %v492 = vadd.s32 %v348, %v460
        %v493 = vadd.s32 %v349, %v461
        %v494 = vadd.s32 %v350, %v462
        %v495 = vadd.s32 %v351, %v463
        %v496 = vadd.s32 %v352, %v464
        %v497 = vadd.s32 %v353, %v465
        %v498 = vadd.s32 %v354, %v466
        %v499 = vadd.s32 %v355, %v467
        %v500 = vadd.s32 %v356, %v468
        %v501 = vadd.s32 %v357, %v469
        %v502 = vadd.s32 %v358, %v470
        %v503 = vadd.s32 %v359, %v471
        %v504 = vadd.s32 %v360, %v472
        %v505 = vadd.s32 %v361, %v473
        %v506 = vadd.s32 %v362, %v474
        %v507 = vadd.s32 %v363, %v475
        %v508 = vadd.s32 %v364, %v476
        %v509 = vadd.s32 %v365, %v477
        %v510 = vadd.s32 %v366, %v478
        %v511 = vadd.s32 %v367, %v479
        %v512 = vadd.s32 %v368, %v480
        %v513 = vadd.s32 %v369, %v481
        %v514 = vadd.s32 %v370, %v482
        %v515 = vadd.s32 %v371, %v483
        %516 = vset.pattern.permute.xlu0 2
        %517 = vperm.xlu0 %516, %v237
        %v518 = vpop.permute.xlu0 %517
        %519 = vset.pattern.permute.xlu0 2
        %520 = vperm.xlu0 %519, %v238
        %v521 = vpop.permute.xlu0 %520
        %522 = vset.pattern.permute.xlu0 2
        %523 = vperm.xlu0 %522, %v239
        %v524 = vpop.permute.xlu0 %523
        %525 = vset.pattern.permute.xlu0 2
        %526 = vperm.xlu0 %525, %v240
        %v527 = vpop.permute.xlu0 %526
        %528 = vset.pattern.permute.xlu0 2
        %529 = vperm.xlu0 %528, %v241
        %v530 = vpop.permute.xlu0 %529
        %531 = vset.pattern.permute.xlu0 2
        %532 = vperm.xlu0 %531, %v242
        %v533 = vpop.permute.xlu0 %532
        %534 = vset.pattern.permute.xlu0 2
        %535 = vperm.xlu0 %534, %v243
        %v536 = vpop.permute.xlu0 %535
        %537 = vset.pattern.permute.xlu0 2
        %538 = vperm.xlu0 %537, %v244
        %v539 = vpop.permute.xlu0 %538
        %540 = vset.pattern.permute.xlu0 2
        %541 = vperm.xlu0 %540, %v245
        %v542 = vpop.permute.xlu0 %541
        %543 = vset.pattern.permute.xlu0 2
        %544 = vperm.xlu0 %543, %v246
        %v545 = vpop.permute.xlu0 %544
        %546 = vset.pattern.permute.xlu0 2
        %547 = vperm.xlu0 %546, %v247
        %v548 = vpop.permute.xlu0 %547
        %549 = vset.pattern.permute.xlu0 2
        %550 = vperm.xlu0 %549, %v248
        %v551 = vpop.permute.xlu0 %550
        %552 = vset.pattern.permute.xlu0 2
        %553 = vperm.xlu0 %552, %v249
        %v554 = vpop.permute.xlu0 %553
        %555 = vset.pattern.permute.xlu0 2
        %556 = vperm.xlu0 %555, %v250
        %v557 = vpop.permute.xlu0 %556
        %558 = vset.pattern.permute.xlu0 2
        %559 = vperm.xlu0 %558, %v251
        %v560 = vpop.permute.xlu0 %559
        %561 = vset.pattern.permute.xlu0 2
        %562 = vperm.xlu0 %561, %v252
        %v563 = vpop.permute.xlu0 %562
        %vm564 = vcmp.eq.s32.totalorder %v518, %v258
        %vm565 = vcmp.eq.s32.totalorder %v518, %v259
        %vm566 = vcmp.eq.s32.totalorder %v521, %v258
        %vm567 = vcmp.eq.s32.totalorder %v521, %v259
        %vm568 = vcmp.eq.s32.totalorder %v524, %v258
        %vm569 = vcmp.eq.s32.totalorder %v524, %v259
        %vm570 = vcmp.eq.s32.totalorder %v527, %v258
        %vm571 = vcmp.eq.s32.totalorder %v527, %v259
        %vm572 = vcmp.eq.s32.totalorder %v530, %v258
        %vm573 = vcmp.eq.s32.totalorder %v530, %v259
        %vm574 = vcmp.eq.s32.totalorder %v533, %v258
        %vm575 = vcmp.eq.s32.totalorder %v533, %v259
        %vm576 = vcmp.eq.s32.totalorder %v536, %v258
        %vm577 = vcmp.eq.s32.totalorder %v536, %v259
        %vm578 = vcmp.eq.s32.totalorder %v539, %v258
        %vm579 = vcmp.eq.s32.totalorder %v539, %v259
        %vm580 = vcmp.eq.s32.totalorder %v542, %v258
        %vm581 = vcmp.eq.s32.totalorder %v542, %v259
        %vm582 = vcmp.eq.s32.totalorder %v545, %v258
        %vm583 = vcmp.eq.s32.totalorder %v545, %v259
        %vm584 = vcmp.eq.s32.totalorder %v548, %v258
        %vm585 = vcmp.eq.s32.totalorder %v548, %v259
        %vm586 = vcmp.eq.s32.totalorder %v551, %v258
        %vm587 = vcmp.eq.s32.totalorder %v551, %v259
        %vm588 = vcmp.eq.s32.totalorder %v554, %v258
        %vm589 = vcmp.eq.s32.totalorder %v554, %v259
        %vm590 = vcmp.eq.s32.totalorder %v557, %v258
        %vm591 = vcmp.eq.s32.totalorder %v557, %v259
        %vm592 = vcmp.eq.s32.totalorder %v560, %v258
        %vm593 = vcmp.eq.s32.totalorder %v560, %v259
        %vm594 = vcmp.eq.s32.totalorder %v563, %v258
        %vm595 = vcmp.eq.s32.totalorder %v563, %v259
        %v596 = vsel %vm564, 1, 0
        %v597 = vsel %vm565, 1, 0
        %v598 = vsel %vm566, 1, 0
        %v599 = vsel %vm567, 1, 0
        %v600 = vsel %vm568, 1, 0
        %v601 = vsel %vm569, 1, 0
        %v602 = vsel %vm570, 1, 0
        %v603 = vsel %vm571, 1, 0
        %v604 = vsel %vm572, 1, 0
        %v605 = vsel %vm573, 1, 0
        %v606 = vsel %vm574, 1, 0
        %v607 = vsel %vm575, 1, 0
        %v608 = vsel %vm576, 1, 0
        %v609 = vsel %vm577, 1, 0
        %v610 = vsel %vm578, 1, 0
        %v611 = vsel %vm579, 1, 0
        %v612 = vsel %vm580, 1, 0
        %v613 = vsel %vm581, 1, 0
        %v614 = vsel %vm582, 1, 0
        %v615 = vsel %vm583, 1, 0
        %v616 = vsel %vm584, 1, 0
        %v617 = vsel %vm585, 1, 0
        %v618 = vsel %vm586, 1, 0
        %v619 = vsel %vm587, 1, 0
        %v620 = vsel %vm588, 1, 0
        %v621 = vsel %vm589, 1, 0
        %v622 = vsel %vm590, 1, 0
        %v623 = vsel %vm591, 1, 0
        %v624 = vsel %vm592, 1, 0
        %v625 = vsel %vm593, 1, 0
        %v626 = vsel %vm594, 1, 0
        %v627 = vsel %vm595, 1, 0
        %v628 = vadd.s32 %v484, %v596
        %v629 = vadd.s32 %v485, %v597
        %v630 = vadd.s32 %v486, %v598
        %v631 = vadd.s32 %v487, %v599
        %v632 = vadd.s32 %v488, %v600
        %v633 = vadd.s32 %v489, %v601
        %v634 = vadd.s32 %v490, %v602
        %v635 = vadd.s32 %v491, %v603
        %v636 = vadd.s32 %v492, %v604
        %v637 = vadd.s32 %v493, %v605
        %v638 = vadd.s32 %v494, %v606
        %v639 = vadd.s32 %v495, %v607
        %v640 = vadd.s32 %v496, %v608
        %v641 = vadd.s32 %v497, %v609
        %v642 = vadd.s32 %v498, %v610
        %v643 = vadd.s32 %v499, %v611
        %v644 = vadd.s32 %v500, %v612
        %v645 = vadd.s32 %v501, %v613
        %v646 = vadd.s32 %v502, %v614
        %v647 = vadd.s32 %v503, %v615
        %v648 = vadd.s32 %v504, %v616
        %v649 = vadd.s32 %v505, %v617
        %v650 = vadd.s32 %v506, %v618
        %v651 = vadd.s32 %v507, %v619
        %v652 = vadd.s32 %v508, %v620
        %v653 = vadd.s32 %v509, %v621
        %v654 = vadd.s32 %v510, %v622
        %v655 = vadd.s32 %v511, %v623
        %v656 = vadd.s32 %v512, %v624
        %v657 = vadd.s32 %v513, %v625
        %v658 = vadd.s32 %v514, %v626
        %v659 = vadd.s32 %v515, %v627
        %660 = vset.pattern.permute.xlu0 3
        %661 = vperm.xlu0 %660, %v237
        %v662 = vpop.permute.xlu0 %661
        %663 = vset.pattern.permute.xlu0 3
        %664 = vperm.xlu0 %663, %v238
        %v665 = vpop.permute.xlu0 %664
        %666 = vset.pattern.permute.xlu0 3
        %667 = vperm.xlu0 %666, %v239
        %v668 = vpop.permute.xlu0 %667
        %669 = vset.pattern.permute.xlu0 3
        %670 = vperm.xlu0 %669, %v240
        %v671 = vpop.permute.xlu0 %670
        %672 = vset.pattern.permute.xlu0 3
        %673 = vperm.xlu0 %672, %v241
        %v674 = vpop.permute.xlu0 %673
        %675 = vset.pattern.permute.xlu0 3
        %676 = vperm.xlu0 %675, %v242
        %v677 = vpop.permute.xlu0 %676
        %678 = vset.pattern.permute.xlu0 3
        %679 = vperm.xlu0 %678, %v243
        %v680 = vpop.permute.xlu0 %679
        %681 = vset.pattern.permute.xlu0 3
        %682 = vperm.xlu0 %681, %v244
        %v683 = vpop.permute.xlu0 %682
        %684 = vset.pattern.permute.xlu0 3
        %685 = vperm.xlu0 %684, %v245
        %v686 = vpop.permute.xlu0 %685
        %687 = vset.pattern.permute.xlu0 3
        %688 = vperm.xlu0 %687, %v246
        %v689 = vpop.permute.xlu0 %688
        %690 = vset.pattern.permute.xlu0 3
        %691 = vperm.xlu0 %690, %v247
        %v692 = vpop.permute.xlu0 %691
        %693 = vset.pattern.permute.xlu0 3
        %694 = vperm.xlu0 %693, %v248
        %v695 = vpop.permute.xlu0 %694
        %696 = vset.pattern.permute.xlu0 3
        %697 = vperm.xlu0 %696, %v249
        %v698 = vpop.permute.xlu0 %697
        %699 = vset.pattern.permute.xlu0 3
        %700 = vperm.xlu0 %699, %v250
        %v701 = vpop.permute.xlu0 %700
        %702 = vset.pattern.permute.xlu0 3
        %703 = vperm.xlu0 %702, %v251
        %v704 = vpop.permute.xlu0 %703
        %705 = vset.pattern.permute.xlu0 3
        %706 = vperm.xlu0 %705, %v252
        %v707 = vpop.permute.xlu0 %706
        %vm708 = vcmp.eq.s32.totalorder %v662, %v258
        %vm709 = vcmp.eq.s32.totalorder %v662, %v259
        %vm710 = vcmp.eq.s32.totalorder %v665, %v258
        %vm711 = vcmp.eq.s32.totalorder %v665, %v259
        %vm712 = vcmp.eq.s32.totalorder %v668, %v258
        %vm713 = vcmp.eq.s32.totalorder %v668, %v259
        %vm714 = vcmp.eq.s32.totalorder %v671, %v258
        %vm715 = vcmp.eq.s32.totalorder %v671, %v259
        %vm716 = vcmp.eq.s32.totalorder %v674, %v258
        %vm717 = vcmp.eq.s32.totalorder %v674, %v259
        %vm718 = vcmp.eq.s32.totalorder %v677, %v258
        %vm719 = vcmp.eq.s32.totalorder %v677, %v259
        %vm720 = vcmp.eq.s32.totalorder %v680, %v258
        %vm721 = vcmp.eq.s32.totalorder %v680, %v259
        %vm722 = vcmp.eq.s32.totalorder %v683, %v258
        %vm723 = vcmp.eq.s32.totalorder %v683, %v259
        %vm724 = vcmp.eq.s32.totalorder %v686, %v258
        %vm725 = vcmp.eq.s32.totalorder %v686, %v259
        %vm726 = vcmp.eq.s32.totalorder %v689, %v258
        %vm727 = vcmp.eq.s32.totalorder %v689, %v259
        %vm728 = vcmp.eq.s32.totalorder %v692, %v258
        %vm729 = vcmp.eq.s32.totalorder %v692, %v259
        %vm730 = vcmp.eq.s32.totalorder %v695, %v258
        %vm731 = vcmp.eq.s32.totalorder %v695, %v259
        %vm732 = vcmp.eq.s32.totalorder %v698, %v258
        %vm733 = vcmp.eq.s32.totalorder %v698, %v259
        %vm734 = vcmp.eq.s32.totalorder %v701, %v258
        %vm735 = vcmp.eq.s32.totalorder %v701, %v259
        %vm736 = vcmp.eq.s32.totalorder %v704, %v258
        %vm737 = vcmp.eq.s32.totalorder %v704, %v259
        %vm738 = vcmp.eq.s32.totalorder %v707, %v258
        %vm739 = vcmp.eq.s32.totalorder %v707, %v259
        %v740 = vsel %vm708, 1, 0
        %v741 = vsel %vm709, 1, 0
        %v742 = vsel %vm710, 1, 0
        %v743 = vsel %vm711, 1, 0
        %v744 = vsel %vm712, 1, 0
        %v745 = vsel %vm713, 1, 0
        %v746 = vsel %vm714, 1, 0
        %v747 = vsel %vm715, 1, 0
        %v748 = vsel %vm716, 1, 0
        %v749 = vsel %vm717, 1, 0
        %v750 = vsel %vm718, 1, 0
        %v751 = vsel %vm719, 1, 0
        %v752 = vsel %vm720, 1, 0
        %v753 = vsel %vm721, 1, 0
        %v754 = vsel %vm722, 1, 0
        %v755 = vsel %vm723, 1, 0
        %v756 = vsel %vm724, 1, 0
        %v757 = vsel %vm725, 1, 0
        %v758 = vsel %vm726, 1, 0
        %v759 = vsel %vm727, 1, 0
        %v760 = vsel %vm728, 1, 0
        %v761 = vsel %vm729, 1, 0
        %v762 = vsel %vm730, 1, 0
        %v763 = vsel %vm731, 1, 0
        %v764 = vsel %vm732, 1, 0
        %v765 = vsel %vm733, 1, 0
        %v766 = vsel %vm734, 1, 0
        %v767 = vsel %vm735, 1, 0
        %v768 = vsel %vm736, 1, 0
        %v769 = vsel %vm737, 1, 0
        %v770 = vsel %vm738, 1, 0
        %v771 = vsel %vm739, 1, 0
        %v772 = vadd.s32 %v628, %v740
        %v773 = vadd.s32 %v629, %v741
        %v774 = vadd.s32 %v630, %v742
        %v775 = vadd.s32 %v631, %v743
        %v776 = vadd.s32 %v632, %v744
        %v777 = vadd.s32 %v633, %v745
        %v778 = vadd.s32 %v634, %v746
        %v779 = vadd.s32 %v635, %v747
        %v780 = vadd.s32 %v636, %v748
        %v781 = vadd.s32 %v637, %v749
        %v782 = vadd.s32 %v638, %v750
        %v783 = vadd.s32 %v639, %v751
        %v784 = vadd.s32 %v640, %v752
        %v785 = vadd.s32 %v641, %v753
        %v786 = vadd.s32 %v642, %v754
        %v787 = vadd.s32 %v643, %v755
        %v788 = vadd.s32 %v644, %v756
        %v789 = vadd.s32 %v645, %v757
        %v790 = vadd.s32 %v646, %v758
        %v791 = vadd.s32 %v647, %v759
        %v792 = vadd.s32 %v648, %v760
        %v793 = vadd.s32 %v649, %v761
        %v794 = vadd.s32 %v650, %v762
        %v795 = vadd.s32 %v651, %v763
        %v796 = vadd.s32 %v652, %v764
        %v797 = vadd.s32 %v653, %v765
        %v798 = vadd.s32 %v654, %v766
        %v799 = vadd.s32 %v655, %v767
        %v800 = vadd.s32 %v656, %v768
        %v801 = vadd.s32 %v657, %v769
        %v802 = vadd.s32 %v658, %v770
        %v803 = vadd.s32 %v659, %v771
        %804 = vset.pattern.permute.xlu0 4
        %805 = vperm.xlu0 %804, %v237
        %v806 = vpop.permute.xlu0 %805
        %807 = vset.pattern.permute.xlu0 4
        %808 = vperm.xlu0 %807, %v238
        %v809 = vpop.permute.xlu0 %808
        %810 = vset.pattern.permute.xlu0 4
        %811 = vperm.xlu0 %810, %v239
        %v812 = vpop.permute.xlu0 %811
        %813 = vset.pattern.permute.xlu0 4
        %814 = vperm.xlu0 %813, %v240
        %v815 = vpop.permute.xlu0 %814
        %816 = vset.pattern.permute.xlu0 4
        %817 = vperm.xlu0 %816, %v241
        %v818 = vpop.permute.xlu0 %817
        %819 = vset.pattern.permute.xlu0 4
        %820 = vperm.xlu0 %819, %v242
        %v821 = vpop.permute.xlu0 %820
        %822 = vset.pattern.permute.xlu0 4
        %823 = vperm.xlu0 %822, %v243
        %v824 = vpop.permute.xlu0 %823
        %825 = vset.pattern.permute.xlu0 4
        %826 = vperm.xlu0 %825, %v244
        %v827 = vpop.permute.xlu0 %826
        %828 = vset.pattern.permute.xlu0 4
        %829 = vperm.xlu0 %828, %v245
        %v830 = vpop.permute.xlu0 %829
        %831 = vset.pattern.permute.xlu0 4
        %832 = vperm.xlu0 %831, %v246
        %v833 = vpop.permute.xlu0 %832
        %834 = vset.pattern.permute.xlu0 4
        %835 = vperm.xlu0 %834, %v247
        %v836 = vpop.permute.xlu0 %835
        %837 = vset.pattern.permute.xlu0 4
        %838 = vperm.xlu0 %837, %v248
        %v839 = vpop.permute.xlu0 %838
        %840 = vset.pattern.permute.xlu0 4
        %841 = vperm.xlu0 %840, %v249
        %v842 = vpop.permute.xlu0 %841
        %843 = vset.pattern.permute.xlu0 4
        %844 = vperm.xlu0 %843, %v250
        %v845 = vpop.permute.xlu0 %844
        %846 = vset.pattern.permute.xlu0 4
        %847 = vperm.xlu0 %846, %v251
        %v848 = vpop.permute.xlu0 %847
        %849 = vset.pattern.permute.xlu0 4
        %850 = vperm.xlu0 %849, %v252
        %v851 = vpop.permute.xlu0 %850
        %vm852 = vcmp.eq.s32.totalorder %v806, %v258
        %vm853 = vcmp.eq.s32.totalorder %v806, %v259
        %vm854 = vcmp.eq.s32.totalorder %v809, %v258
        %vm855 = vcmp.eq.s32.totalorder %v809, %v259
        %vm856 = vcmp.eq.s32.totalorder %v812, %v258
        %vm857 = vcmp.eq.s32.totalorder %v812, %v259
        %vm858 = vcmp.eq.s32.totalorder %v815, %v258
        %vm859 = vcmp.eq.s32.totalorder %v815, %v259
        %vm860 = vcmp.eq.s32.totalorder %v818, %v258
        %vm861 = vcmp.eq.s32.totalorder %v818, %v259
        %vm862 = vcmp.eq.s32.totalorder %v821, %v258
        %vm863 = vcmp.eq.s32.totalorder %v821, %v259
        %vm864 = vcmp.eq.s32.totalorder %v824, %v258
        %vm865 = vcmp.eq.s32.totalorder %v824, %v259
        %vm866 = vcmp.eq.s32.totalorder %v827, %v258
        %vm867 = vcmp.eq.s32.totalorder %v827, %v259
        %vm868 = vcmp.eq.s32.totalorder %v830, %v258
        %vm869 = vcmp.eq.s32.totalorder %v830, %v259
        %vm870 = vcmp.eq.s32.totalorder %v833, %v258
        %vm871 = vcmp.eq.s32.totalorder %v833, %v259
        %vm872 = vcmp.eq.s32.totalorder %v836, %v258
        %vm873 = vcmp.eq.s32.totalorder %v836, %v259
        %vm874 = vcmp.eq.s32.totalorder %v839, %v258
        %vm875 = vcmp.eq.s32.totalorder %v839, %v259
        %vm876 = vcmp.eq.s32.totalorder %v842, %v258
        %vm877 = vcmp.eq.s32.totalorder %v842, %v259
        %vm878 = vcmp.eq.s32.totalorder %v845, %v258
        %vm879 = vcmp.eq.s32.totalorder %v845, %v259
        %vm880 = vcmp.eq.s32.totalorder %v848, %v258
        %vm881 = vcmp.eq.s32.totalorder %v848, %v259
        %vm882 = vcmp.eq.s32.totalorder %v851, %v258
        %vm883 = vcmp.eq.s32.totalorder %v851, %v259
        %v884 = vsel %vm852, 1, 0
        %v885 = vsel %vm853, 1, 0
        %v886 = vsel %vm854, 1, 0
        %v887 = vsel %vm855, 1, 0
        %v888 = vsel %vm856, 1, 0
        %v889 = vsel %vm857, 1, 0
        %v890 = vsel %vm858, 1, 0
        %v891 = vsel %vm859, 1, 0
        %v892 = vsel %vm860, 1, 0
        %v893 = vsel %vm861, 1, 0
        %v894 = vsel %vm862, 1, 0
        %v895 = vsel %vm863, 1, 0
        %v896 = vsel %vm864, 1, 0
        %v897 = vsel %vm865, 1, 0
        %v898 = vsel %vm866, 1, 0
        %v899 = vsel %vm867, 1, 0
        %v900 = vsel %vm868, 1, 0
        %v901 = vsel %vm869, 1, 0
        %v902 = vsel %vm870, 1, 0
        %v903 = vsel %vm871, 1, 0
        %v904 = vsel %vm872, 1, 0
        %v905 = vsel %vm873, 1, 0
        %v906 = vsel %vm874, 1, 0
        %v907 = vsel %vm875, 1, 0
        %v908 = vsel %vm876, 1, 0
        %v909 = vsel %vm877, 1, 0
        %v910 = vsel %vm878, 1, 0
        %v911 = vsel %vm879, 1, 0
        %v912 = vsel %vm880, 1, 0
        %v913 = vsel %vm881, 1, 0
        %v914 = vsel %vm882, 1, 0
        %v915 = vsel %vm883, 1, 0
        %v916 = vadd.s32 %v772, %v884
        %v917 = vadd.s32 %v773, %v885
        %v918 = vadd.s32 %v774, %v886
        %v919 = vadd.s32 %v775, %v887
        %v920 = vadd.s32 %v776, %v888
        %v921 = vadd.s32 %v777, %v889
        %v922 = vadd.s32 %v778, %v890
        %v923 = vadd.s32 %v779, %v891
        %v924 = vadd.s32 %v780, %v892
        %v925 = vadd.s32 %v781, %v893
        %v926 = vadd.s32 %v782, %v894
        %v927 = vadd.s32 %v783, %v895
        %v928 = vadd.s32 %v784, %v896
        %v929 = vadd.s32 %v785, %v897
        %v930 = vadd.s32 %v786, %v898
        %v931 = vadd.s32 %v787, %v899
        %v932 = vadd.s32 %v788, %v900
        %v933 = vadd.s32 %v789, %v901
        %v934 = vadd.s32 %v790, %v902
        %v935 = vadd.s32 %v791, %v903
        %v936 = vadd.s32 %v792, %v904
        %v937 = vadd.s32 %v793, %v905
        %v938 = vadd.s32 %v794, %v906
        %v939 = vadd.s32 %v795, %v907
        %v940 = vadd.s32 %v796, %v908
        %v941 = vadd.s32 %v797, %v909
        %v942 = vadd.s32 %v798, %v910
        %v943 = vadd.s32 %v799, %v911
        %v944 = vadd.s32 %v800, %v912
        %v945 = vadd.s32 %v801, %v913
        %v946 = vadd.s32 %v802, %v914
        %v947 = vadd.s32 %v803, %v915
        %948 = vset.pattern.permute.xlu0 5
        %949 = vperm.xlu0 %948, %v237
        %v950 = vpop.permute.xlu0 %949
        %951 = vset.pattern.permute.xlu0 5
        %952 = vperm.xlu0 %951, %v238
        %v953 = vpop.permute.xlu0 %952
        %954 = vset.pattern.permute.xlu0 5
        %955 = vperm.xlu0 %954, %v239
        %v956 = vpop.permute.xlu0 %955
        %957 = vset.pattern.permute.xlu0 5
        %958 = vperm.xlu0 %957, %v240
        %v959 = vpop.permute.xlu0 %958
        %960 = vset.pattern.permute.xlu0 5
        %961 = vperm.xlu0 %960, %v241
        %v962 = vpop.permute.xlu0 %961
        %963 = vset.pattern.permute.xlu0 5
        %964 = vperm.xlu0 %963, %v242
        %v965 = vpop.permute.xlu0 %964
        %966 = vset.pattern.permute.xlu0 5
        %967 = vperm.xlu0 %966, %v243
        %v968 = vpop.permute.xlu0 %967
        %969 = vset.pattern.permute.xlu0 5
        %970 = vperm.xlu0 %969, %v244
        %v971 = vpop.permute.xlu0 %970
        %972 = vset.pattern.permute.xlu0 5
        %973 = vperm.xlu0 %972, %v245
        %v974 = vpop.permute.xlu0 %973
        %975 = vset.pattern.permute.xlu0 5
        %976 = vperm.xlu0 %975, %v246
        %v977 = vpop.permute.xlu0 %976
        %978 = vset.pattern.permute.xlu0 5
        %979 = vperm.xlu0 %978, %v247
        %v980 = vpop.permute.xlu0 %979
        %981 = vset.pattern.permute.xlu0 5
        %982 = vperm.xlu0 %981, %v248
        %v983 = vpop.permute.xlu0 %982
        %984 = vset.pattern.permute.xlu0 5
        %985 = vperm.xlu0 %984, %v249
        %v986 = vpop.permute.xlu0 %985
        %987 = vset.pattern.permute.xlu0 5
        %988 = vperm.xlu0 %987, %v250
        %v989 = vpop.permute.xlu0 %988
        %990 = vset.pattern.permute.xlu0 5
        %991 = vperm.xlu0 %990, %v251
        %v992 = vpop.permute.xlu0 %991
        %993 = vset.pattern.permute.xlu0 5
        %994 = vperm.xlu0 %993, %v252
        %v995 = vpop.permute.xlu0 %994
        %vm996 = vcmp.eq.s32.totalorder %v950, %v258
        %vm997 = vcmp.eq.s32.totalorder %v950, %v259
        %vm998 = vcmp.eq.s32.totalorder %v953, %v258
        %vm999 = vcmp.eq.s32.totalorder %v953, %v259
        %vm1000 = vcmp.eq.s32.totalorder %v956, %v258
        %vm1001 = vcmp.eq.s32.totalorder %v956, %v259
        %vm1002 = vcmp.eq.s32.totalorder %v959, %v258
        %vm1003 = vcmp.eq.s32.totalorder %v959, %v259
        %vm1004 = vcmp.eq.s32.totalorder %v962, %v258
        %vm1005 = vcmp.eq.s32.totalorder %v962, %v259
        %vm1006 = vcmp.eq.s32.totalorder %v965, %v258
        %vm1007 = vcmp.eq.s32.totalorder %v965, %v259
        %vm1008 = vcmp.eq.s32.totalorder %v968, %v258
        %vm1009 = vcmp.eq.s32.totalorder %v968, %v259
        %vm1010 = vcmp.eq.s32.totalorder %v971, %v258
        %vm1011 = vcmp.eq.s32.totalorder %v971, %v259
        %vm1012 = vcmp.eq.s32.totalorder %v974, %v258
        %vm1013 = vcmp.eq.s32.totalorder %v974, %v259
        %vm1014 = vcmp.eq.s32.totalorder %v977, %v258
        %vm1015 = vcmp.eq.s32.totalorder %v977, %v259
        %vm1016 = vcmp.eq.s32.totalorder %v980, %v258
        %vm1017 = vcmp.eq.s32.totalorder %v980, %v259
        %vm1018 = vcmp.eq.s32.totalorder %v983, %v258
        %vm1019 = vcmp.eq.s32.totalorder %v983, %v259
        %vm1020 = vcmp.eq.s32.totalorder %v986, %v258
        %vm1021 = vcmp.eq.s32.totalorder %v986, %v259
        %vm1022 = vcmp.eq.s32.totalorder %v989, %v258
        %vm1023 = vcmp.eq.s32.totalorder %v989, %v259
        %vm1024 = vcmp.eq.s32.totalorder %v992, %v258
        %vm1025 = vcmp.eq.s32.totalorder %v992, %v259
        %vm1026 = vcmp.eq.s32.totalorder %v995, %v258
        %vm1027 = vcmp.eq.s32.totalorder %v995, %v259
        %v1028 = vsel %vm996, 1, 0
        %v1029 = vsel %vm997, 1, 0
        %v1030 = vsel %vm998, 1, 0
        %v1031 = vsel %vm999, 1, 0
        %v1032 = vsel %vm1000, 1, 0
        %v1033 = vsel %vm1001, 1, 0
        %v1034 = vsel %vm1002, 1, 0
        %v1035 = vsel %vm1003, 1, 0
        %v1036 = vsel %vm1004, 1, 0
        %v1037 = vsel %vm1005, 1, 0
        %v1038 = vsel %vm1006, 1, 0
        %v1039 = vsel %vm1007, 1, 0
        %v1040 = vsel %vm1008, 1, 0
        %v1041 = vsel %vm1009, 1, 0
        %v1042 = vsel %vm1010, 1, 0
        %v1043 = vsel %vm1011, 1, 0
        %v1044 = vsel %vm1012, 1, 0
        %v1045 = vsel %vm1013, 1, 0
        %v1046 = vsel %vm1014, 1, 0
        %v1047 = vsel %vm1015, 1, 0
        %v1048 = vsel %vm1016, 1, 0
        %v1049 = vsel %vm1017, 1, 0
        %v1050 = vsel %vm1018, 1, 0
        %v1051 = vsel %vm1019, 1, 0
        %v1052 = vsel %vm1020, 1, 0
        %v1053 = vsel %vm1021, 1, 0
        %v1054 = vsel %vm1022, 1, 0
        %v1055 = vsel %vm1023, 1, 0
        %v1056 = vsel %vm1024, 1, 0
        %v1057 = vsel %vm1025, 1, 0
        %v1058 = vsel %vm1026, 1, 0
        %v1059 = vsel %vm1027, 1, 0
        %v1060 = vadd.s32 %v916, %v1028
        %v1061 = vadd.s32 %v917, %v1029
        %v1062 = vadd.s32 %v918, %v1030
        %v1063 = vadd.s32 %v919, %v1031
        %v1064 = vadd.s32 %v920, %v1032
        %v1065 = vadd.s32 %v921, %v1033
        %v1066 = vadd.s32 %v922, %v1034
        %v1067 = vadd.s32 %v923, %v1035
        %v1068 = vadd.s32 %v924, %v1036
        %v1069 = vadd.s32 %v925, %v1037
        %v1070 = vadd.s32 %v926, %v1038
        %v1071 = vadd.s32 %v927, %v1039
        %v1072 = vadd.s32 %v928, %v1040
        %v1073 = vadd.s32 %v929, %v1041
        %v1074 = vadd.s32 %v930, %v1042
        %v1075 = vadd.s32 %v931, %v1043
        %v1076 = vadd.s32 %v932, %v1044
        %v1077 = vadd.s32 %v933, %v1045
        %v1078 = vadd.s32 %v934, %v1046
        %v1079 = vadd.s32 %v935, %v1047
        %v1080 = vadd.s32 %v936, %v1048
        %v1081 = vadd.s32 %v937, %v1049
        %v1082 = vadd.s32 %v938, %v1050
        %v1083 = vadd.s32 %v939, %v1051
        %v1084 = vadd.s32 %v940, %v1052
        %v1085 = vadd.s32 %v941, %v1053
        %v1086 = vadd.s32 %v942, %v1054
        %v1087 = vadd.s32 %v943, %v1055
        %v1088 = vadd.s32 %v944, %v1056
        %v1089 = vadd.s32 %v945, %v1057
        %v1090 = vadd.s32 %v946, %v1058
        %v1091 = vadd.s32 %v947, %v1059
        %1092 = vset.pattern.permute.xlu0 6
        %1093 = vperm.xlu0 %1092, %v237
        %v1094 = vpop.permute.xlu0 %1093
        %1095 = vset.pattern.permute.xlu0 6
        %1096 = vperm.xlu0 %1095, %v238
        %v1097 = vpop.permute.xlu0 %1096
        %1098 = vset.pattern.permute.xlu0 6
        %1099 = vperm.xlu0 %1098, %v239
        %v1100 = vpop.permute.xlu0 %1099
        %1101 = vset.pattern.permute.xlu0 6
        %1102 = vperm.xlu0 %1101, %v240
        %v1103 = vpop.permute.xlu0 %1102
        %1104 = vset.pattern.permute.xlu0 6
        %1105 = vperm.xlu0 %1104, %v241
        %v1106 = vpop.permute.xlu0 %1105
        %1107 = vset.pattern.permute.xlu0 6
        %1108 = vperm.xlu0 %1107, %v242
        %v1109 = vpop.permute.xlu0 %1108
        %1110 = vset.pattern.permute.xlu0 6
        %1111 = vperm.xlu0 %1110, %v243
        %v1112 = vpop.permute.xlu0 %1111
        %1113 = vset.pattern.permute.xlu0 6
        %1114 = vperm.xlu0 %1113, %v244
        %v1115 = vpop.permute.xlu0 %1114
        %1116 = vset.pattern.permute.xlu0 6
        %1117 = vperm.xlu0 %1116, %v245
        %v1118 = vpop.permute.xlu0 %1117
        %1119 = vset.pattern.permute.xlu0 6
        %1120 = vperm.xlu0 %1119, %v246
        %v1121 = vpop.permute.xlu0 %1120
        %1122 = vset.pattern.permute.xlu0 6
        %1123 = vperm.xlu0 %1122, %v247
        %v1124 = vpop.permute.xlu0 %1123
        %1125 = vset.pattern.permute.xlu0 6
        %1126 = vperm.xlu0 %1125, %v248
        %v1127 = vpop.permute.xlu0 %1126
        %1128 = vset.pattern.permute.xlu0 6
        %1129 = vperm.xlu0 %1128, %v249
        %v1130 = vpop.permute.xlu0 %1129
        %1131 = vset.pattern.permute.xlu0 6
        %1132 = vperm.xlu0 %1131, %v250
        %v1133 = vpop.permute.xlu0 %1132
        %1134 = vset.pattern.permute.xlu0 6
        %1135 = vperm.xlu0 %1134, %v251
        %v1136 = vpop.permute.xlu0 %1135
        %1137 = vset.pattern.permute.xlu0 6
        %1138 = vperm.xlu0 %1137, %v252
        %v1139 = vpop.permute.xlu0 %1138
        %vm1140 = vcmp.eq.s32.totalorder %v1094, %v258
        %vm1141 = vcmp.eq.s32.totalorder %v1094, %v259
        %vm1142 = vcmp.eq.s32.totalorder %v1097, %v258
        %vm1143 = vcmp.eq.s32.totalorder %v1097, %v259
        %vm1144 = vcmp.eq.s32.totalorder %v1100, %v258
        %vm1145 = vcmp.eq.s32.totalorder %v1100, %v259
        %vm1146 = vcmp.eq.s32.totalorder %v1103, %v258
        %vm1147 = vcmp.eq.s32.totalorder %v1103, %v259
        %vm1148 = vcmp.eq.s32.totalorder %v1106, %v258
        %vm1149 = vcmp.eq.s32.totalorder %v1106, %v259
        %vm1150 = vcmp.eq.s32.totalorder %v1109, %v258
        %vm1151 = vcmp.eq.s32.totalorder %v1109, %v259
        %vm1152 = vcmp.eq.s32.totalorder %v1112, %v258
        %vm1153 = vcmp.eq.s32.totalorder %v1112, %v259
        %vm1154 = vcmp.eq.s32.totalorder %v1115, %v258
        %vm1155 = vcmp.eq.s32.totalorder %v1115, %v259
        %vm1156 = vcmp.eq.s32.totalorder %v1118, %v258
        %vm1157 = vcmp.eq.s32.totalorder %v1118, %v259
        %vm1158 = vcmp.eq.s32.totalorder %v1121, %v258
        %vm1159 = vcmp.eq.s32.totalorder %v1121, %v259
        %vm1160 = vcmp.eq.s32.totalorder %v1124, %v258
        %vm1161 = vcmp.eq.s32.totalorder %v1124, %v259
        %vm1162 = vcmp.eq.s32.totalorder %v1127, %v258
        %vm1163 = vcmp.eq.s32.totalorder %v1127, %v259
        %vm1164 = vcmp.eq.s32.totalorder %v1130, %v258
        %vm1165 = vcmp.eq.s32.totalorder %v1130, %v259
        %vm1166 = vcmp.eq.s32.totalorder %v1133, %v258
        %vm1167 = vcmp.eq.s32.totalorder %v1133, %v259
        %vm1168 = vcmp.eq.s32.totalorder %v1136, %v258
        %vm1169 = vcmp.eq.s32.totalorder %v1136, %v259
        %vm1170 = vcmp.eq.s32.totalorder %v1139, %v258
        %vm1171 = vcmp.eq.s32.totalorder %v1139, %v259
        %v1172 = vsel %vm1140, 1, 0
        %v1173 = vsel %vm1141, 1, 0
        %v1174 = vsel %vm1142, 1, 0
        %v1175 = vsel %vm1143, 1, 0
        %v1176 = vsel %vm1144, 1, 0
        %v1177 = vsel %vm1145, 1, 0
        %v1178 = vsel %vm1146, 1, 0
        %v1179 = vsel %vm1147, 1, 0
        %v1180 = vsel %vm1148, 1, 0
        %v1181 = vsel %vm1149, 1, 0
        %v1182 = vsel %vm1150, 1, 0
        %v1183 = vsel %vm1151, 1, 0
        %v1184 = vsel %vm1152, 1, 0
        %v1185 = vsel %vm1153, 1, 0
        %v1186 = vsel %vm1154, 1, 0
        %v1187 = vsel %vm1155, 1, 0
        %v1188 = vsel %vm1156, 1, 0
        %v1189 = vsel %vm1157, 1, 0
        %v1190 = vsel %vm1158, 1, 0
        %v1191 = vsel %vm1159, 1, 0
        %v1192 = vsel %vm1160, 1, 0
        %v1193 = vsel %vm1161, 1, 0
        %v1194 = vsel %vm1162, 1, 0
        %v1195 = vsel %vm1163, 1, 0
        %v1196 = vsel %vm1164, 1, 0
        %v1197 = vsel %vm1165, 1, 0
        %v1198 = vsel %vm1166, 1, 0
        %v1199 = vsel %vm1167, 1, 0
        %v1200 = vsel %vm1168, 1, 0
        %v1201 = vsel %vm1169, 1, 0
        %v1202 = vsel %vm1170, 1, 0
        %v1203 = vsel %vm1171, 1, 0
        %v1204 = vadd.s32 %v1060, %v1172
        %v1205 = vadd.s32 %v1061, %v1173
        %v1206 = vadd.s32 %v1062, %v1174
        %v1207 = vadd.s32 %v1063, %v1175
        %v1208 = vadd.s32 %v1064, %v1176
        %v1209 = vadd.s32 %v1065, %v1177
        %v1210 = vadd.s32 %v1066, %v1178
        %v1211 = vadd.s32 %v1067, %v1179
        %v1212 = vadd.s32 %v1068, %v1180
        %v1213 = vadd.s32 %v1069, %v1181
        %v1214 = vadd.s32 %v1070, %v1182
        %v1215 = vadd.s32 %v1071, %v1183
        %v1216 = vadd.s32 %v1072, %v1184
        %v1217 = vadd.s32 %v1073, %v1185
        %v1218 = vadd.s32 %v1074, %v1186
        %v1219 = vadd.s32 %v1075, %v1187
        %v1220 = vadd.s32 %v1076, %v1188
        %v1221 = vadd.s32 %v1077, %v1189
        %v1222 = vadd.s32 %v1078, %v1190
        %v1223 = vadd.s32 %v1079, %v1191
        %v1224 = vadd.s32 %v1080, %v1192
        %v1225 = vadd.s32 %v1081, %v1193
        %v1226 = vadd.s32 %v1082, %v1194
        %v1227 = vadd.s32 %v1083, %v1195
        %v1228 = vadd.s32 %v1084, %v1196
        %v1229 = vadd.s32 %v1085, %v1197
        %v1230 = vadd.s32 %v1086, %v1198
        %v1231 = vadd.s32 %v1087, %v1199
        %v1232 = vadd.s32 %v1088, %v1200
        %v1233 = vadd.s32 %v1089, %v1201
        %v1234 = vadd.s32 %v1090, %v1202
        %v1235 = vadd.s32 %v1091, %v1203
        %1236 = vset.pattern.permute.xlu0 7
        %1237 = vperm.xlu0 %1236, %v237
        %v1238 = vpop.permute.xlu0 %1237
        %1239 = vset.pattern.permute.xlu0 7
        %1240 = vperm.xlu0 %1239, %v238
        %v1241 = vpop.permute.xlu0 %1240
        %1242 = vset.pattern.permute.xlu0 7
        %1243 = vperm.xlu0 %1242, %v239
        %v1244 = vpop.permute.xlu0 %1243
        %1245 = vset.pattern.permute.xlu0 7
        %1246 = vperm.xlu0 %1245, %v240
        %v1247 = vpop.permute.xlu0 %1246
        %1248 = vset.pattern.permute.xlu0 7
        %1249 = vperm.xlu0 %1248, %v241
        %v1250 = vpop.permute.xlu0 %1249
        %1251 = vset.pattern.permute.xlu0 7
        %1252 = vperm.xlu0 %1251, %v242
        %v1253 = vpop.permute.xlu0 %1252
        %1254 = vset.pattern.permute.xlu0 7
        %1255 = vperm.xlu0 %1254, %v243
        %v1256 = vpop.permute.xlu0 %1255
        %1257 = vset.pattern.permute.xlu0 7
        %1258 = vperm.xlu0 %1257, %v244
        %v1259 = vpop.permute.xlu0 %1258
        %1260 = vset.pattern.permute.xlu0 7
        %1261 = vperm.xlu0 %1260, %v245
        %v1262 = vpop.permute.xlu0 %1261
        %1263 = vset.pattern.permute.xlu0 7
        %1264 = vperm.xlu0 %1263, %v246
        %v1265 = vpop.permute.xlu0 %1264
        %1266 = vset.pattern.permute.xlu0 7
        %1267 = vperm.xlu0 %1266, %v247
        %v1268 = vpop.permute.xlu0 %1267
        %1269 = vset.pattern.permute.xlu0 7
        %1270 = vperm.xlu0 %1269, %v248
        %v1271 = vpop.permute.xlu0 %1270
        %1272 = vset.pattern.permute.xlu0 7
        %1273 = vperm.xlu0 %1272, %v249
        %v1274 = vpop.permute.xlu0 %1273
        %1275 = vset.pattern.permute.xlu0 7
        %1276 = vperm.xlu0 %1275, %v250
        %v1277 = vpop.permute.xlu0 %1276
        %1278 = vset.pattern.permute.xlu0 7
        %1279 = vperm.xlu0 %1278, %v251
        %v1280 = vpop.permute.xlu0 %1279
        %1281 = vset.pattern.permute.xlu0 7
        %1282 = vperm.xlu0 %1281, %v252
        %v1283 = vpop.permute.xlu0 %1282
        %vm1284 = vcmp.eq.s32.totalorder %v1238, %v258
        %vm1285 = vcmp.eq.s32.totalorder %v1238, %v259
        %vm1286 = vcmp.eq.s32.totalorder %v1241, %v258
        %vm1287 = vcmp.eq.s32.totalorder %v1241, %v259
        %vm1288 = vcmp.eq.s32.totalorder %v1244, %v258
        %vm1289 = vcmp.eq.s32.totalorder %v1244, %v259
        %vm1290 = vcmp.eq.s32.totalorder %v1247, %v258
        %vm1291 = vcmp.eq.s32.totalorder %v1247, %v259
        %vm1292 = vcmp.eq.s32.totalorder %v1250, %v258
        %vm1293 = vcmp.eq.s32.totalorder %v1250, %v259
        %vm1294 = vcmp.eq.s32.totalorder %v1253, %v258
        %vm1295 = vcmp.eq.s32.totalorder %v1253, %v259
        %vm1296 = vcmp.eq.s32.totalorder %v1256, %v258
        %vm1297 = vcmp.eq.s32.totalorder %v1256, %v259
        %vm1298 = vcmp.eq.s32.totalorder %v1259, %v258
        %vm1299 = vcmp.eq.s32.totalorder %v1259, %v259
        %vm1300 = vcmp.eq.s32.totalorder %v1262, %v258
        %vm1301 = vcmp.eq.s32.totalorder %v1262, %v259
        %vm1302 = vcmp.eq.s32.totalorder %v1265, %v258
        %vm1303 = vcmp.eq.s32.totalorder %v1265, %v259
        %vm1304 = vcmp.eq.s32.totalorder %v1268, %v258
        %vm1305 = vcmp.eq.s32.totalorder %v1268, %v259
        %vm1306 = vcmp.eq.s32.totalorder %v1271, %v258
        %vm1307 = vcmp.eq.s32.totalorder %v1271, %v259
        %vm1308 = vcmp.eq.s32.totalorder %v1274, %v258
        %vm1309 = vcmp.eq.s32.totalorder %v1274, %v259
        %vm1310 = vcmp.eq.s32.totalorder %v1277, %v258
        %vm1311 = vcmp.eq.s32.totalorder %v1277, %v259
        %vm1312 = vcmp.eq.s32.totalorder %v1280, %v258
        %vm1313 = vcmp.eq.s32.totalorder %v1280, %v259
        %vm1314 = vcmp.eq.s32.totalorder %v1283, %v258
        %vm1315 = vcmp.eq.s32.totalorder %v1283, %v259
        %v1316 = vsel %vm1284, 1, 0
        %v1317 = vsel %vm1285, 1, 0
        %v1318 = vsel %vm1286, 1, 0
        %v1319 = vsel %vm1287, 1, 0
        %v1320 = vsel %vm1288, 1, 0
        %v1321 = vsel %vm1289, 1, 0
        %v1322 = vsel %vm1290, 1, 0
        %v1323 = vsel %vm1291, 1, 0
        %v1324 = vsel %vm1292, 1, 0
        %v1325 = vsel %vm1293, 1, 0
        %v1326 = vsel %vm1294, 1, 0
        %v1327 = vsel %vm1295, 1, 0
        %v1328 = vsel %vm1296, 1, 0
        %v1329 = vsel %vm1297, 1, 0
        %v1330 = vsel %vm1298, 1, 0
        %v1331 = vsel %vm1299, 1, 0
        %v1332 = vsel %vm1300, 1, 0
        %v1333 = vsel %vm1301, 1, 0
        %v1334 = vsel %vm1302, 1, 0
        %v1335 = vsel %vm1303, 1, 0
        %v1336 = vsel %vm1304, 1, 0
        %v1337 = vsel %vm1305, 1, 0
        %v1338 = vsel %vm1306, 1, 0
        %v1339 = vsel %vm1307, 1, 0
        %v1340 = vsel %vm1308, 1, 0
        %v1341 = vsel %vm1309, 1, 0
        %v1342 = vsel %vm1310, 1, 0
        %v1343 = vsel %vm1311, 1, 0
        %v1344 = vsel %vm1312, 1, 0
        %v1345 = vsel %vm1313, 1, 0
        %v1346 = vsel %vm1314, 1, 0
        %v1347 = vsel %vm1315, 1, 0
        %v1348 = vadd.s32 %v1204, %v1316
        %v1349 = vadd.s32 %v1205, %v1317
        %v1350 = vadd.s32 %v1206, %v1318
        %v1351 = vadd.s32 %v1207, %v1319
        %v1352 = vadd.s32 %v1208, %v1320
        %v1353 = vadd.s32 %v1209, %v1321
        %v1354 = vadd.s32 %v1210, %v1322
        %v1355 = vadd.s32 %v1211, %v1323
        %v1356 = vadd.s32 %v1212, %v1324
        %v1357 = vadd.s32 %v1213, %v1325
        %v1358 = vadd.s32 %v1214, %v1326
        %v1359 = vadd.s32 %v1215, %v1327
        %v1360 = vadd.s32 %v1216, %v1328
        %v1361 = vadd.s32 %v1217, %v1329
        %v1362 = vadd.s32 %v1218, %v1330
        %v1363 = vadd.s32 %v1219, %v1331
        %v1364 = vadd.s32 %v1220, %v1332
        %v1365 = vadd.s32 %v1221, %v1333
        %v1366 = vadd.s32 %v1222, %v1334
        %v1367 = vadd.s32 %v1223, %v1335
        %v1368 = vadd.s32 %v1224, %v1336
        %v1369 = vadd.s32 %v1225, %v1337
        %v1370 = vadd.s32 %v1226, %v1338
        %v1371 = vadd.s32 %v1227, %v1339
        %v1372 = vadd.s32 %v1228, %v1340
        %v1373 = vadd.s32 %v1229, %v1341
        %v1374 = vadd.s32 %v1230, %v1342
        %v1375 = vadd.s32 %v1231, %v1343
        %v1376 = vadd.s32 %v1232, %v1344
        %v1377 = vadd.s32 %v1233, %v1345
        %v1378 = vadd.s32 %v1234, %v1346
        %v1379 = vadd.s32 %v1235, %v1347
        %v1380 = vld [vmem:[#allocation2] sm:$0xff]
        %v1381 = vld [vmem:[#allocation2 + $0x8] sm:$0xff]
        %v1382 = vld [vmem:[#allocation2 + $0x10] sm:$0xff]
        %v1383 = vld [vmem:[#allocation2 + $0x18] sm:$0xff]
        %v1384 = vld [vmem:[#allocation2 + $0x20] sm:$0xff]
        %v1385 = vld [vmem:[#allocation2 + $0x28] sm:$0xff]
        %v1386 = vld [vmem:[#allocation2 + $0x30] sm:$0xff]
        %v1387 = vld [vmem:[#allocation2 + $0x38] sm:$0xff]
        %v1388 = vld [vmem:[#allocation2 + $0x40] sm:$0xff]
        %v1389 = vld [vmem:[#allocation2 + $0x48] sm:$0xff]
        %v1390 = vld [vmem:[#allocation2 + $0x50] sm:$0xff]
        %v1391 = vld [vmem:[#allocation2 + $0x58] sm:$0xff]
        %v1392 = vld [vmem:[#allocation2 + $0x60] sm:$0xff]
        %v1393 = vld [vmem:[#allocation2 + $0x68] sm:$0xff]
        %v1394 = vld [vmem:[#allocation2 + $0x70] sm:$0xff]
        %v1395 = vld [vmem:[#allocation2 + $0x78] sm:$0xff]
        %v1396 = vcvt.s32.f32 %v1348
        %v1397 = vcvt.s32.f32 %v1349
        %v1398 = vcvt.s32.f32 %v1350
        %v1399 = vcvt.s32.f32 %v1351
        %v1400 = vcvt.s32.f32 %v1352
        %v1401 = vcvt.s32.f32 %v1353
        %v1402 = vcvt.s32.f32 %v1354
        %v1403 = vcvt.s32.f32 %v1355
        %v1404 = vcvt.s32.f32 %v1356
        %v1405 = vcvt.s32.f32 %v1357
        %v1406 = vcvt.s32.f32 %v1358
        %v1407 = vcvt.s32.f32 %v1359
        %v1408 = vcvt.s32.f32 %v1360
        %v1409 = vcvt.s32.f32 %v1361
        %v1410 = vcvt.s32.f32 %v1362
        %v1411 = vcvt.s32.f32 %v1363
        %v1412 = vcvt.s32.f32 %v1364
        %v1413 = vcvt.s32.f32 %v1365
        %v1414 = vcvt.s32.f32 %v1366
        %v1415 = vcvt.s32.f32 %v1367
        %v1416 = vcvt.s32.f32 %v1368
        %v1417 = vcvt.s32.f32 %v1369
        %v1418 = vcvt.s32.f32 %v1370
        %v1419 = vcvt.s32.f32 %v1371
        %v1420 = vcvt.s32.f32 %v1372
        %v1421 = vcvt.s32.f32 %v1373
        %v1422 = vcvt.s32.f32 %v1374
        %v1423 = vcvt.s32.f32 %v1375
        %v1424 = vcvt.s32.f32 %v1376
        %v1425 = vcvt.s32.f32 %v1377
        %v1426 = vcvt.s32.f32 %v1378
        %v1427 = vcvt.s32.f32 %v1379
        %v1428 = vpack.c.bf16 %v1398, %v1396
        %v1429 = vpack.c.bf16 %v1399, %v1397
        %v1430 = vpack.c.bf16 %v1402, %v1400
        %v1431 = vpack.c.bf16 %v1403, %v1401
        %v1432 = vpack.c.bf16 %v1406, %v1404
        %v1433 = vpack.c.bf16 %v1407, %v1405
        %v1434 = vpack.c.bf16 %v1410, %v1408
        %v1435 = vpack.c.bf16 %v1411, %v1409
        %v1436 = vpack.c.bf16 %v1414, %v1412
        %v1437 = vpack.c.bf16 %v1415, %v1413
        %v1438 = vpack.c.bf16 %v1418, %v1416
        %v1439 = vpack.c.bf16 %v1419, %v1417
        %v1440 = vpack.c.bf16 %v1422, %v1420
        %v1441 = vpack.c.bf16 %v1423, %v1421
        %v1442 = vpack.c.bf16 %v1426, %v1424
        %v1443 = vpack.c.bf16 %v1427, %v1425
        %v1444 = vld [vmem:[%s213] sm:$0xf]
        %v1445 = vld [vmem:[%s213 + $0x4] sm:$0xf]
        %v1446 = vld [vmem:[%s213 + $0x8] sm:$0xf]
        %v1447 = vld [vmem:[%s213 + $0xc] sm:$0xf]
        %v1448 = vld [vmem:[%s213 + $0x10] sm:$0xf]
        %v1449 = vld [vmem:[%s213 + $0x14] sm:$0xf]
        %v1450 = vld [vmem:[%s213 + $0x18] sm:$0xf]
        %v1451 = vld [vmem:[%s213 + $0x1c] sm:$0xf]
        %v1452 = vld [vmem:[%s213 + $0x20] sm:$0xf]
        %v1453 = vld [vmem:[%s213 + $0x24] sm:$0xf]
        %v1454 = vld [vmem:[%s213 + $0x28] sm:$0xf]
        %v1455 = vld [vmem:[%s213 + $0x2c] sm:$0xf]
        %v1456 = vld [vmem:[%s213 + $0x30] sm:$0xf]
        %v1457 = vld [vmem:[%s213 + $0x34] sm:$0xf]
        %v1458 = vld [vmem:[%s213 + $0x38] sm:$0xf]
        %v1459 = vld [vmem:[%s213 + $0x3c] sm:$0xf]
        %v1460 = vld [vmem:[%s213 + $0x40] sm:$0xf]
        %v1461 = vld [vmem:[%s213 + $0x44] sm:$0xf]
        %v1462 = vld [vmem:[%s213 + $0x48] sm:$0xf]
        %v1463 = vld [vmem:[%s213 + $0x4c] sm:$0xf]
        %v1464 = vld [vmem:[%s213 + $0x50] sm:$0xf]
        %v1465 = vld [vmem:[%s213 + $0x54] sm:$0xf]
        %v1466 = vld [vmem:[%s213 + $0x58] sm:$0xf]
        %v1467 = vld [vmem:[%s213 + $0x5c] sm:$0xf]
        %v1468 = vld [vmem:[%s213 + $0x60] sm:$0xf]
        %v1469 = vld [vmem:[%s213 + $0x64] sm:$0xf]
        %v1470 = vld [vmem:[%s213 + $0x68] sm:$0xf]
        %v1471 = vld [vmem:[%s213 + $0x6c] sm:$0xf]
        %v1472 = vld [vmem:[%s213 + $0x70] sm:$0xf]
        %v1473 = vld [vmem:[%s213 + $0x74] sm:$0xf]
        %v1474 = vld [vmem:[%s213 + $0x78] sm:$0xf]
        %v1475 = vld [vmem:[%s213 + $0x7c] sm:$0xf]
        %v1508 = vunpack.c.l.b16 %v1444
        %v1509 = vunpack.c.l.b16 %v1445
        %v1510 = vunpack.c.l.b16 %v1446
        %v1511 = vunpack.c.l.b16 %v1447
        %v1512 = vunpack.c.l.b16 %v1448
        %v1513 = vunpack.c.l.b16 %v1449
        %v1514 = vunpack.c.l.b16 %v1450
        %v1515 = vunpack.c.l.b16 %v1451
        %v1516 = vunpack.c.l.b16 %v1452
        %v1517 = vunpack.c.l.b16 %v1453
        %v1518 = vunpack.c.l.b16 %v1454
        %v1519 = vunpack.c.l.b16 %v1455
        %v1520 = vunpack.c.l.b16 %v1456
        %v1521 = vunpack.c.l.b16 %v1457
        %v1522 = vunpack.c.l.b16 %v1458
        %v1523 = vunpack.c.l.b16 %v1459
        %v1524 = vunpack.c.l.b16 %v1460
        %v1525 = vunpack.c.l.b16 %v1461
        %v1526 = vunpack.c.l.b16 %v1462
        %v1527 = vunpack.c.l.b16 %v1463
        %v1528 = vunpack.c.l.b16 %v1464
        %v1529 = vunpack.c.l.b16 %v1465
        %v1530 = vunpack.c.l.b16 %v1466
        %v1531 = vunpack.c.l.b16 %v1467
        %v1532 = vunpack.c.l.b16 %v1468
        %v1533 = vunpack.c.l.b16 %v1469
        %v1534 = vunpack.c.l.b16 %v1470
        %v1535 = vunpack.c.l.b16 %v1471
        %v1536 = vunpack.c.l.b16 %v1472
        %v1537 = vunpack.c.l.b16 %v1473
        %v1538 = vunpack.c.l.b16 %v1474
        %v1539 = vunpack.c.l.b16 %v1475
        %v1540 = vpack.c.b16 %v1509, %v1508
        %v1541 = vpack.c.b16 %v1511, %v1510
        %v1542 = vpack.c.b16 %v1513, %v1512
        %v1543 = vpack.c.b16 %v1515, %v1514
        %v1544 = vpack.c.b16 %v1517, %v1516
        %v1545 = vpack.c.b16 %v1519, %v1518
        %v1546 = vpack.c.b16 %v1521, %v1520
        %v1547 = vpack.c.b16 %v1523, %v1522
        %v1548 = vpack.c.b16 %v1525, %v1524
        %v1549 = vpack.c.b16 %v1527, %v1526
        %v1550 = vpack.c.b16 %v1529, %v1528
        %v1551 = vpack.c.b16 %v1531, %v1530
        %v1552 = vpack.c.b16 %v1533, %v1532
        %v1553 = vpack.c.b16 %v1535, %v1534
        %v1554 = vpack.c.b16 %v1537, %v1536
        %v1555 = vpack.c.b16 %v1539, %v1538
        %1572 = vmatprep.subr.bf16.mxu0 0
        %1573 = vmatpush1.bf16.msra.mxu0 %v1540
        %1574 = vmatprep.subr.bf16.mxu0 0
        %1575 = vmatpush1.bf16.msra.mxu0 %v1541
        %1576 = vmatprep.subr.bf16.mxu0 0
        %1577 = vmatpush1.bf16.msra.mxu0 %v1542
        %1578 = vmatprep.subr.bf16.mxu0 0
        %1579 = vmatpush1.bf16.msra.mxu0 %v1543
        %1580 = vmatprep.subr.bf16.mxu0 0
        %1581 = vmatpush1.bf16.msra.mxu0 %v1544
        %1582 = vmatprep.subr.bf16.mxu0 0
        %1583 = vmatpush1.bf16.msra.mxu0 %v1545
        %1584 = vmatprep.subr.bf16.mxu0 0
        %1585 = vmatpush1.bf16.msra.mxu0 %v1546
        %1586 = vmatprep.subr.bf16.mxu0 0
        %1587 = vmatpush1.bf16.msra.mxu0 %v1547
        %1588 = vmatprep.subr.bf16.mxu0 0
        %1589 = vmatpush1.bf16.msra.mxu0 %v1548
        %1590 = vmatprep.subr.bf16.mxu0 0
        %1591 = vmatpush1.bf16.msra.mxu0 %v1549
        %1592 = vmatprep.subr.bf16.mxu0 0
        %1593 = vmatpush1.bf16.msra.mxu0 %v1550
        %1594 = vmatprep.subr.bf16.mxu0 0
        %1595 = vmatpush1.bf16.msra.mxu0 %v1551
        %1596 = vmatprep.subr.bf16.mxu0 0
        %1597 = vmatpush1.bf16.msra.mxu0 %v1552
        %1598 = vmatprep.subr.bf16.mxu0 0
        %1599 = vmatpush1.bf16.msra.mxu0 %v1553
        %1600 = vmatprep.subr.bf16.mxu0 0
        %1601 = vmatpush1.bf16.msra.mxu0 %v1554
        %1602 = vmatprep.subr.bf16.mxu0 0
        %1603 = vmatpush1.bf16.msra.mxu0 %v1555
        %1604 = vmatprep.mubr.bf16.mxu0 %v1429
        %1605 = vmatmul.mubr.bf16.gmra.mrb[0].mxu0 %v1428
        %v1606 = vpop.f32.mrb[0].mxu0
        %v1607 = vadd.f32 0.0, %v1606
        %v1608 = vpop.f32.mrb[0].mxu0
        %v1609 = vpop.f32.mrb[0].mxu0
        %v1610 = vadd.f32 0.0, %v1609
        %v1611 = vpop.f32.mrb[0].mxu0
        %1612 = vmatprep.mubr.bf16.mxu0 %v1431
        %1613 = vmatmul.mubr.bf16.gmra.mrb[0].mxu0 %v1430
        %v1614 = vpop.f32.mrb[0].mxu0
        %v1615 = vadd.f32 0.0, %v1614
        %v1616 = vpop.f32.mrb[0].mxu0
        %v1617 = vpop.f32.mrb[0].mxu0
        %v1618 = vadd.f32 0.0, %v1617
        %v1619 = vpop.f32.mrb[0].mxu0
        %1620 = vmatprep.mubr.bf16.mxu0 %v1433
        %1621 = vmatmul.mubr.bf16.gmra.mrb[0].mxu0 %v1432
        %v1622 = vpop.f32.mrb[0].mxu0
        %v1623 = vadd.f32 0.0, %v1622
        %v1624 = vpop.f32.mrb[0].mxu0
        %v1625 = vpop.f32.mrb[0].mxu0
        %v1626 = vadd.f32 0.0, %v1625
        %v1627 = vpop.f32.mrb[0].mxu0
        %1628 = vmatprep.mubr.bf16.mxu0 %v1435
        %1629 = vmatmul.mubr.bf16.gmra.mrb[0].mxu0 %v1434
        %v1630 = vpop.f32.mrb[0].mxu0
        %v1631 = vadd.f32 0.0, %v1630
        %v1632 = vpop.f32.mrb[0].mxu0
        %v1633 = vpop.f32.mrb[0].mxu0
        %v1634 = vadd.f32 0.0, %v1633
        %v1635 = vpop.f32.mrb[0].mxu0
        %1636 = vmatprep.mubr.bf16.mxu0 %v1437
        %1637 = vmatmul.mubr.bf16.gmra.mrb[0].mxu0 %v1436
        %v1638 = vpop.f32.mrb[0].mxu0
        %v1639 = vadd.f32 0.0, %v1638
        %v1640 = vpop.f32.mrb[0].mxu0
        %v1641 = vpop.f32.mrb[0].mxu0
        %v1642 = vadd.f32 0.0, %v1641
        %v1643 = vpop.f32.mrb[0].mxu0
        %1644 = vmatprep.mubr.bf16.mxu0 %v1439
        %1645 = vmatmul.mubr.bf16.gmra.mrb[0].mxu0 %v1438
        %v1646 = vpop.f32.mrb[0].mxu0
        %v1647 = vadd.f32 0.0, %v1646
        %v1648 = vpop.f32.mrb[0].mxu0
        %v1649 = vpop.f32.mrb[0].mxu0
        %v1650 = vadd.f32 0.0, %v1649
        %v1651 = vpop.f32.mrb[0].mxu0
        %1652 = vmatprep.mubr.bf16.mxu0 %v1441
        %1653 = vmatmul.mubr.bf16.gmra.mrb[0].mxu0 %v1440
        %v1654 = vpop.f32.mrb[0].mxu0
        %v1655 = vadd.f32 0.0, %v1654
        %v1656 = vpop.f32.mrb[0].mxu0
        %v1657 = vpop.f32.mrb[0].mxu0
        %v1658 = vadd.f32 0.0, %v1657
        %v1659 = vpop.f32.mrb[0].mxu0
        %1660 = vmatprep.mubr.bf16.mxu0 %v1443
        %1661 = vmatmul.mubr.bf16.gmra.mrb[0].mxu0 %v1442
        %v1662 = vpop.f32.mrb[0].mxu0
        %v1663 = vadd.f32 0.0, %v1662
        %v1664 = vpop.f32.mrb[0].mxu0
        %v1665 = vpop.f32.mrb[0].mxu0
        %v1666 = vadd.f32 0.0, %v1665
        %v1667 = vpop.f32.mrb[0].mxu0
        %1668 = vdwg.mxu0
        %v1669 = vadd.f32 %v1380, %v1607
        %v1670 = vadd.f32 %v1381, %v1610
        %v1671 = vadd.f32 %v1382, %v1615
        %v1672 = vadd.f32 %v1383, %v1618
        %v1673 = vadd.f32 %v1384, %v1623
        %v1674 = vadd.f32 %v1385, %v1626
        %v1675 = vadd.f32 %v1386, %v1631
        %v1676 = vadd.f32 %v1387, %v1634
        %v1677 = vadd.f32 %v1388, %v1639
        %v1678 = vadd.f32 %v1389, %v1642
        %v1679 = vadd.f32 %v1390, %v1647
        %v1680 = vadd.f32 %v1391, %v1650
        %v1681 = vadd.f32 %v1392, %v1655
        %v1682 = vadd.f32 %v1393, %v1658
        %v1683 = vadd.f32 %v1394, %v1663
        %v1684 = vadd.f32 %v1395, %v1666
        %1685 = vst [vmem:[#allocation2] sm:$0xff] %v1669
        %1686 = vst [vmem:[#allocation2 + $0x8] sm:$0xff] %v1670
        %1687 = vst [vmem:[#allocation2 + $0x10] sm:$0xff] %v1671
        %1688 = vst [vmem:[#allocation2 + $0x18] sm:$0xff] %v1672
        %1689 = vst [vmem:[#allocation2 + $0x20] sm:$0xff] %v1673
        %1690 = vst [vmem:[#allocation2 + $0x28] sm:$0xff] %v1674
        %1691 = vst [vmem:[#allocation2 + $0x30] sm:$0xff] %v1675
        %1692 = vst [vmem:[#allocation2 + $0x38] sm:$0xff] %v1676
        %1693 = vst [vmem:[#allocation2 + $0x40] sm:$0xff] %v1677
        %1694 = vst [vmem:[#allocation2 + $0x48] sm:$0xff] %v1678
        %1695 = vst [vmem:[#allocation2 + $0x50] sm:$0xff] %v1679
        %1696 = vst [vmem:[#allocation2 + $0x58] sm:$0xff] %v1680
        %1697 = vst [vmem:[#allocation2 + $0x60] sm:$0xff] %v1681
        %1698 = vst [vmem:[#allocation2 + $0x68] sm:$0xff] %v1682
        %1699 = vst [vmem:[#allocation2 + $0x70] sm:$0xff] %v1683
        %1700 = vst [vmem:[#allocation2 + $0x78] sm:$0xff] %v1684
        %p1701 = scmp.eq.s32.totalorder %s23, 1
        // Predicated region
        $region33: #{tpu_custom_call.1} parent=27 // pred_check
          %p1702 = pneg %p1701
        $region34: #{tpu_custom_call.1} parent=27 // pred_check_branch
          %1704 = sbr.rel (%p1702) target = $region36
        $region35: #{tpu_custom_call.1} parent=27 // pred_region
          %v1705 = vld [vmem:[#allocation2] sm:$0xff]
          %v1706 = vld [vmem:[#allocation2 + $0x8] sm:$0xff]
          %v1707 = vld [vmem:[#allocation2 + $0x10] sm:$0xff]
          %v1708 = vld [vmem:[#allocation2 + $0x18] sm:$0xff]
          %v1709 = vld [vmem:[#allocation2 + $0x20] sm:$0xff]
          %v1710 = vld [vmem:[#allocation2 + $0x28] sm:$0xff]
          %v1711 = vld [vmem:[#allocation2 + $0x30] sm:$0xff]
          %v1712 = vld [vmem:[#allocation2 + $0x38] sm:$0xff]
          %v1713 = vld [vmem:[#allocation2 + $0x40] sm:$0xff]
          %v1714 = vld [vmem:[#allocation2 + $0x48] sm:$0xff]
          %v1715 = vld [vmem:[#allocation2 + $0x50] sm:$0xff]
          %v1716 = vld [vmem:[#allocation2 + $0x58] sm:$0xff]
          %v1717 = vld [vmem:[#allocation2 + $0x60] sm:$0xff]
          %v1718 = vld [vmem:[#allocation2 + $0x68] sm:$0xff]
          %v1719 = vld [vmem:[#allocation2 + $0x70] sm:$0xff]
          %v1720 = vld [vmem:[#allocation2 + $0x78] sm:$0xff]
          %1721 = vst [vmem:[%s194] sm:$0xff] %v1705
          %1722 = vst [vmem:[%s194 + $0x8] sm:$0xff] %v1706
          %1723 = vst [vmem:[%s194 + $0x10] sm:$0xff] %v1707
          %1724 = vst [vmem:[%s194 + $0x18] sm:$0xff] %v1708
          %1725 = vst [vmem:[%s194 + $0x20] sm:$0xff] %v1709
          %1726 = vst [vmem:[%s194 + $0x28] sm:$0xff] %v1710
          %1727 = vst [vmem:[%s194 + $0x30] sm:$0xff] %v1711
          %1728 = vst [vmem:[%s194 + $0x38] sm:$0xff] %v1712
          %1729 = vst [vmem:[%s194 + $0x40] sm:$0xff] %v1713
          %1730 = vst [vmem:[%s194 + $0x48] sm:$0xff] %v1714
          %1731 = vst [vmem:[%s194 + $0x50] sm:$0xff] %v1715
          %1732 = vst [vmem:[%s194 + $0x58] sm:$0xff] %v1716
          %1733 = vst [vmem:[%s194 + $0x60] sm:$0xff] %v1717
          %1734 = vst [vmem:[%s194 + $0x68] sm:$0xff] %v1718
          %1735 = vst [vmem:[%s194 + $0x70] sm:$0xff] %v1719
          %1736 = vst [vmem:[%s194 + $0x78] sm:$0xff] %v1720
        $region36: #{tpu_custom_call.1} parent=27 // pred_fallthru
          _
        %s1737 = sand.u32 %s101, 1
        %s1738 = scalar_lea.sflag [#allocation4], %s1737
        %s1739 = sand.u32 %s101, 1
        %s1740 = smul.addr %s1739, 128
        %s1741 = scalar_lea.vmem [#allocation3], %s1740
        // Predicated region
        $region37: #{tpu_custom_call.1} parent=27 // pred_check
          %p1742 = pneg %p111
        $region38: #{tpu_custom_call.1} parent=27 // pred_check_branch
          %1744 = sbr.rel (%p1742) target = $region40
        $region39: #{tpu_custom_call.1} parent=27 // pred_region
          %s1745 = smul.u32 16, %s22
          %s1747 = ssub.s32 2048, 2048
          %1748 = vsyncadd %s1738, %s1747
          %s1749 = smul.addr %s1745, 2
          %s1750 = sadd.s32 %s21, %s1749
          %s1751 = smul.addr %s1750, 128
          %s1752 = scalar_lea.hbm %s2, %s1751
          %s1753 = sshll.u32 %s1741, 4
          %s1754 = int_to_ptr.vmem [resolvable:$true] %s1753
          %1759 = dma.vmem_to_hbm [thread:$0]  %s1754, 2048, %s1752, %s1738, 128, 256, 8
        $region40: #{tpu_custom_call.1} parent=27 // pred_fallthru
          _
      $region28: #{tpu_custom_call.1} parent=5 // pred_fallthru
        _
      %p1760 = scmp.le.s32.totalorder 2, %s11
      // Predicated region
      $region41: #{tpu_custom_call.1} parent=5 // pred_check
        %p1761 = pneg %p1760
      $region42: #{tpu_custom_call.1} parent=5 // pred_check_branch
        %1763 = sbr.rel (%p1761) target = $region44
      $region43: #{tpu_custom_call.1} parent=5 // pred_region
        %s1764 = ssub.s32 %s11, 2
        // Predicated region
        $region45: #{tpu_custom_call.1} parent=43 // pred_check
          %p1765 = pneg %p117
        $region46: #{tpu_custom_call.1} parent=43 // pred_check_branch
          %1767 = sbr.rel (%p1765) target = $region48
        $region47: #{tpu_custom_call.1} parent=43 // pred_region
          %s1768 = sand.u32 %s102, 1
          %s1769 = scalar_lea.sflag [#allocation4], %s1768
          %s1770 = sand.u32 %s102, 1
          %s1771 = smul.addr %s1770, 128
          %s1772 = scalar_lea.vmem [#allocation3], %s1771
          %1773 = dma.done %s1769, 2048
        $region48: #{tpu_custom_call.1} parent=43 // pred_fallthru
          _
      $region44: #{tpu_custom_call.1} parent=5 // pred_fallthru
        _
    $region6: #{tpu_custom_call.1} parent=1 // loop_footer
      %s15 = sadd.s32 1, %s11
    $region7: #{tpu_custom_call.1} parent=1 // loop_footer_branch
      %10 = sbr.rel target = $region3
    $region8: #{tpu_custom_call.1} parent=1 // loop_exit
      _
    %1774 = vsyncpa [#allocation4], 1
    %s1775 = scalar_lea.sflag [#allocation4], 1
    %1776 = vsyncpa %s1775, 1

</llo_original>
